<compile_context>
chip_gen: v7x
topology: tpu7x:2x2x1
jax: 0.10.0
libtpu: 0.0.40
codegen_flags: <defaults>
</compile_context>

<pallas_src>
import functools

import jax
import jax.numpy as jnp
from jax.experimental import pallas as pl
from jax.experimental.pallas import tpu as pltpu


def _round_up(x, m):
    return ((x + m - 1) // m) * m


def _round_down(x, m):
    return (x // m) * m


def _vq_kernel(x_ref, codes_ref, esqh_ref, q_ref, inds_ref, sse_ref,
               *, m_valid, m_total):
    # x_ref    : (TM, dim)       activation rows for this tile (input dtype)
    # codes_ref: (n_embed, dim)  codebook = embed.T (f32), resident across steps
    # esqh_ref : (1, n_embed)    0.5 * ||e_j||^2 (precomputed once in wrapper)
    # q_ref    : (TM, dim)       quantized rows (input dtype)
    # inds_ref : (1, 1, TM)      nearest-code index, lane-dense (int32)
    # sse_ref  : (1, 1, dim)     per-tile partial sum of squared error (f32)
    tm = x_ref.shape[0]
    x = x_ref[...].astype(jnp.float32)
    codes = codes_ref[...]
    n_embed = codes.shape[0]

    # Single MXU matmul (A @ B^T pattern, K = dim).
    scores = jnp.einsum("md,nd->mn", x, codes,
                        preferred_element_type=jnp.float32)       # (TM, n_embed)

    # argmin_j ||x - e_j||^2 == argmin_j (0.5*||e_j||^2 - x.e_j):
    # the per-row ||x||^2 constant and the global x2 scale cannot change the
    # argmin or the tie mask, and dist is never returned, so they are dropped.
    half_dist = esqh_ref[...] - scores                            # (TM, n_embed)

    # argmin along the lane axis; ties -> smallest index (matches torch.argmin).
    min_d = jnp.min(half_dist, axis=1, keepdims=True)             # (TM, 1)
    col_ids = jax.lax.broadcasted_iota(jnp.int32, half_dist.shape, 1)
    masked_ids = jnp.where(half_dist == min_d, col_ids, n_embed)  # (TM, n_embed)
    inds_col = jnp.min(masked_ids, axis=1, keepdims=True)         # (TM, 1)

    # Gather-free codebook lookup: one_hot @ codes on the MXU (K = n_embed).
    one_hot = (col_ids == inds_col).astype(jnp.float32)           # (TM, n_embed)
    q = jnp.dot(one_hot, codes, preferred_element_type=jnp.float32)
    q_ref[...] = q.astype(q_ref.dtype)

    # Lane-dense index output: transpose the masked-iota matrix on the XLU
    # (which has slack here) and min-reduce over sublanes, so the index store
    # is one full (1, TM) lane-dense row instead of TM/8 masked stores.
    inds_row = jnp.min(jnp.transpose(masked_ids), axis=0, keepdims=True)
    inds_ref[0] = inds_row                                        # (1, TM)

    # Fused partial SSE for the VQ loss (finalized in the wrapper).
    diff = q - x
    sq = diff * diff
    if m_valid != m_total:  # only kernels with a padded last tile mask rows
        row_ids = (pl.program_id(0) * tm
                   + jax.lax.broadcasted_iota(jnp.int32, (tm, 1), 0))
        sq = jnp.where(row_ids < m_valid, sq, 0.0)
    sse_ref[0] = jnp.sum(sq, axis=0, keepdims=True)               # (1, dim)


def _pick_row_tile(M, dim, n_embed):
    # Per-step VMEM working set (bytes):
    #   double-buffered x & q tiles : 2 * 2 * tm * dim * 4
    #   (tm, n_embed) intermediates : ~6 * tm * n_embed * 4
    # Budget ~12 MiB so every generation's scoped VMEM default is respected
    # (16 MiB v5e, 32 MiB v6e/v7x scoped; 64 MiB physical per core on v7x).
    budget = 12 * 1024 * 1024
    per_row = 4 * (4 * dim + 6 * n_embed)
    tm = max(128, min(1024, _round_down(budget // per_row, 128)))
    # Keep >= 2 grid tiles so v7x's second TensorCore gets work and the
    # pipeline has depth; never let the grid collapse to a single step.
    tm = min(tm, _round_up(pl.cdiv(M, 2), 8))
    return max(tm, 8)


def quantizer_pallas(x_bhwc, embed, *, beta=0.25, tm=None):
    """x_bhwc: (B, H, W, C) channels-last.  embed: (dim, n_embed)."""
    B, H, W, C = x_bhwc.shape
    dim, n_embed = embed.shape
    assert C == dim, "last input dim must equal codebook dim"
    M = B * H * W

    if tm is None:
        tm = _pick_row_tile(M, dim, n_embed)
    tm = max(8, _round_up(min(tm, _round_up(M, 8)), 8))
    M_pad = _round_up(M, tm)
    num_tiles = M_pad // tm

    # Glue (all tiny / layout-free): flatten rows (free for channels-last
    # input), transpose the small codebook once, precompute half squared norms.
    # No dtype cast of the big activation in the wrapper.
    x_flat = jnp.reshape(x_bhwc, (M, dim))
    if M_pad != M:
        # TODO(synk): padding is one extra HBM pass over x; a masked last tile
        #             would avoid it.
        x_flat = jnp.pad(x_flat, ((0, M_pad - M), (0, 0)))
    codes = jnp.transpose(embed).astype(jnp.float32)               # (n_embed, dim)
    e_sq_half = 0.5 * jnp.sum(codes * codes, axis=1)[None, :]      # (1, n_embed)

    kernel = functools.partial(_vq_kernel, m_valid=M, m_total=M_pad)

    q_flat, inds_rows, sse = pl.pallas_call(
        kernel,
        out_shape=(
            jax.ShapeDtypeStruct((M_pad, dim), x_bhwc.dtype),
            jax.ShapeDtypeStruct((num_tiles, 1, tm), jnp.int32),
            jax.ShapeDtypeStruct((num_tiles, 1, dim), jnp.float32),
        ),
        grid=(num_tiles,),
        in_specs=[
            pl.BlockSpec((tm, dim), lambda i: (i, 0)),
            pl.BlockSpec((n_embed, dim), lambda i: (0, 0)),        # resident
            pl.BlockSpec((1, n_embed), lambda i: (0, 0)),          # resident
        ],
        out_specs=(
            pl.BlockSpec((tm, dim), lambda i: (i, 0)),
            pl.BlockSpec((1, 1, tm), lambda i: (i, 0, 0)),         # lane-dense
            pl.BlockSpec((1, 1, dim), lambda i: (i, 0, 0)),        # lane-vector
        ),
        compiler_params=pltpu.CompilerParams(
            dimension_semantics=("parallel",),
            vmem_limit_bytes=32 * 1024 * 1024,
        ),
    )(x_flat, codes, e_sq_half)

    if M_pad != M:
        q_flat = q_flat[:M]
        inds_flat = inds_rows.reshape(M_pad)[:M]
    else:
        inds_flat = inds_rows.reshape(M)

    q = q_flat.reshape(B, H, W, dim)
    inds = inds_flat.reshape(B, H, W)
    mse = jnp.sum(sse) / (M * dim)
    vq_loss = beta * mse + mse
    # Straight-through estimator: forward value of x + (q - x).detach() is q.
    return q, vq_loss, inds


def quantizer_ref(x, embed, *, beta=0.25):
    """Pure-JAX reference matching the PyTorch module's eval forward."""
    dim, n_embed = embed.shape
    flatten = x.reshape(-1, dim)
    dist = (jnp.sum(flatten ** 2, axis=1, keepdims=True)
            - 2.0 * (flatten @ embed)
            + jnp.sum(embed ** 2, axis=0, keepdims=True))
    inds = jnp.argmin(dist, axis=1)
    q = jnp.take(jnp.transpose(embed), inds, axis=0).reshape(x.shape)
    mse = jnp.mean((q - x) ** 2)
    vq_loss = beta * mse + mse
    return q, vq_loss, inds.reshape(x.shape[:-1])


if __name__ == "__main__":
    B, H, W, dim, n_embed = 2, 16, 16, 64, 128

    key = jax.random.PRNGKey(0)
    kx, ke = jax.random.split(key)
    x = jax.random.normal(kx, (B, H, W, dim), dtype=jnp.float32)
    embed = jax.random.normal(ke, (dim, n_embed), dtype=jnp.float32)

    q, vq_loss, inds = quantizer_pallas(x, embed)
    q = jax.block_until_ready(q)
    vq_loss = jax.block_until_ready(vq_loss)
    inds = jax.block_until_ready(inds)

    q_r, loss_r, inds_r = quantizer_ref(x, embed)

    assert q.shape == (B, H, W, dim)
    assert inds.shape == (B, H, W)
    assert bool(jnp.all(inds == inds_r)), "index mismatch vs reference"
    assert jnp.allclose(q, q_r, rtol=1e-5, atol=1e-5), "quantized mismatch"
    assert jnp.allclose(vq_loss, loss_r, rtol=1e-4, atol=1e-6), "loss mismatch"

    print("KERNEL_OK")
</pallas_src>

<mosaic_0001>
module attributes {stable_mosaic.version = 11 : i64} {
  func.func @_vq_kernel(%arg0: i32, %arg1: memref<256x64xf32, #tpu.memory_space<vmem>>, %arg2: memref<128x64xf32, #tpu.memory_space<vmem>>, %arg3: memref<1x128xf32, #tpu.memory_space<vmem>>, %arg4: memref<256x64xf32, #tpu.memory_space<vmem>>, %arg5: memref<1x1x256xi32, #tpu.memory_space<vmem>>, %arg6: memref<1x1x64xf32, #tpu.memory_space<vmem>>) attributes {dimension_semantics = [#tpu.dimension_semantics<parallel>], iteration_bounds = array<i64: 2>, scalar_prefetch = 0 : i64, scratch_operands = 0 : i64, tpu.core_type = #tpu.core_type<tc>, window_params = [{transform_indices = @transform_0, window_bounds = array<i64: 256, 64>}, {pipeline_mode = #tpu.pipeline_mode<synchronous>, transform_indices = @transform_1, window_bounds = array<i64: 128, 64>}, {pipeline_mode = #tpu.pipeline_mode<synchronous>, transform_indices = @transform_2, window_bounds = array<i64: 1, 128>}, {transform_indices = @transform_3, window_bounds = array<i64: 256, 64>}, {transform_indices = @transform_4, window_bounds = array<i64: 1, 1, 256>}, {transform_indices = @transform_5, window_bounds = array<i64: 1, 1, 64>}]} {
    %c0 = arith.constant 0 : index
    %c0_0 = arith.constant 0 : index
    %0 = vector.load %arg1[%c0, %c0_0] : memref<256x64xf32, #tpu.memory_space<vmem>>, vector<256x64xf32>
    %c0_1 = arith.constant 0 : index
    %c0_2 = arith.constant 0 : index
    %1 = vector.load %arg2[%c0_1, %c0_2] : memref<128x64xf32, #tpu.memory_space<vmem>>, vector<128x64xf32>
    "tpu.trace_start"() <{level = 10 : i32, message = "md,nd->mn"}> : () -> ()
    %cst = arith.constant dense<0.000000e+00> : vector<256x128xf32>
    %2 = tpu.matmul %0, %1, %cst {dimension_numbers = #tpu.dot_dimension_numbers<[1], [1], [0], [0], [0, 0, 1, 0], [], []>} : vector<256x64xf32>, vector<128x64xf32>, vector<256x128xf32> -> vector<256x128xf32>
    "tpu.trace_stop"() : () -> ()
    %c0_3 = arith.constant 0 : index
    %c0_4 = arith.constant 0 : index
    %3 = vector.load %arg3[%c0_3, %c0_4] : memref<1x128xf32, #tpu.memory_space<vmem>>, vector<1x128xf32>
    %4 = vector.broadcast %3 : vector<1x128xf32> to vector<256x128xf32>
    %5 = arith.subf %4, %2 : vector<256x128xf32>
    %cst_5 = arith.constant dense<0x7F800000> : vector<256xf32>
    %6 = vector.multi_reduction <minimumf>, %5, %cst_5 [1] : vector<256x128xf32> to vector<256xf32>
    %7 = vector.shape_cast %6 : vector<256xf32> to vector<256x1xf32>
    %8 = tpu.iota {dimensions = array<i32: 1>} : vector<256x128xi32>
    %9 = vector.broadcast %7 : vector<256x1xf32> to vector<256x128xf32>
    %10 = arith.cmpf oeq, %5, %9 : vector<256x128xf32>
    %c128_i32 = arith.constant 128 : i32
    %11 = vector.broadcast %c128_i32 : i32 to vector<256x128xi32>
    %12 = arith.select %10, %8, %11 : vector<256x128xi1>, vector<256x128xi32>
    %cst_6 = arith.constant dense<2147483647> : vector<256xi32>
    %13 = vector.multi_reduction <minsi>, %12, %cst_6 [1] : vector<256x128xi32> to vector<256xi32>
    %14 = vector.shape_cast %13 : vector<256xi32> to vector<256x1xi32>
    %15 = vector.broadcast %14 : vector<256x1xi32> to vector<256x128xi32>
    %16 = arith.cmpi eq, %8, %15 : vector<256x128xi32>
    %17 = arith.extui %16 : vector<256x128xi1> to vector<256x128xi32>
    %18 = arith.sitofp %17 : vector<256x128xi32> to vector<256x128xf32>
    %cst_7 = arith.constant dense<0.000000e+00> : vector<256x64xf32>
    %19 = tpu.matmul %18, %1, %cst_7 {dimension_numbers = #tpu.dot_dimension_numbers<[1], [0], [0], [1], [0, 0, 1, 1], [], []>} : vector<256x128xf32>, vector<128x64xf32>, vector<256x64xf32> -> vector<256x64xf32>
    %c0_8 = arith.constant 0 : index
    %c0_9 = arith.constant 0 : index
    %20 = vector.load %arg4[%c0_8, %c0_9] : memref<256x64xf32, #tpu.memory_space<vmem>>, vector<256x64xf32>
    tpu.vector_store %arg4[%c0_8, %c0_9], %19 {strides = array<i32>} : memref<256x64xf32, #tpu.memory_space<vmem>>, vector<256x64xf32>,
    %21 = tpu.transpose %12, [1, 0] : vector<256x128xi32> -> vector<128x256xi32>
    %cst_10 = arith.constant dense<2147483647> : vector<256xi32>
    %22 = vector.multi_reduction <minsi>, %21, %cst_10 [0] : vector<128x256xi32> to vector<256xi32>
    %23 = vector.shape_cast %22 : vector<256xi32> to vector<1x256xi32>
    %c0_11 = arith.constant 0 : index
    %c0_12 = arith.constant 0 : index
    %c0_13 = arith.constant 0 : index
    %24 = vector.load %arg5[%c0_11, %c0_12, %c0_13] : memref<1x1x256xi32, #tpu.memory_space<vmem>>, vector<1x1x256xi32>
    %25 = vector.shape_cast %24 : vector<1x1x256xi32> to vector<1x256xi32>
    %26 = vector.shape_cast %23 : vector<1x256xi32> to vector<1x1x256xi32>
    tpu.vector_store %arg5[%c0_11, %c0_12, %c0_13], %26 {strides = array<i32>} : memref<1x1x256xi32, #tpu.memory_space<vmem>>, vector<1x1x256xi32>,
    %27 = arith.subf %19, %0 : vector<256x64xf32>
    %28 = arith.mulf %27, %27 : vector<256x64xf32>
    %cst_14 = arith.constant dense<0.000000e+00> : vector<64xf32>
    %29 = vector.multi_reduction <add>, %28, %cst_14 [0] : vector<256x64xf32> to vector<64xf32>
    %30 = vector.shape_cast %29 : vector<64xf32> to vector<1x64xf32>
    %c0_15 = arith.constant 0 : index
    %c0_16 = arith.constant 0 : index
    %c0_17 = arith.constant 0 : index
    %31 = vector.load %arg6[%c0_15, %c0_16, %c0_17] : memref<1x1x64xf32, #tpu.memory_space<vmem>>, vector<1x1x64xf32>
    %32 = vector.shape_cast %31 : vector<1x1x64xf32> to vector<1x64xf32>
    %33 = vector.shape_cast %30 : vector<1x64xf32> to vector<1x1x64xf32>
    tpu.vector_store %arg6[%c0_15, %c0_16, %c0_17], %33 {strides = array<i32>} : memref<1x1x64xf32, #tpu.memory_space<vmem>>, vector<1x1x64xf32>,
    return
  }
  func.func @transform_0(%arg0: i32) -> (i32, i32) {
    %c0_i32 = arith.constant 0 : i32
    %c0_i32_0 = arith.constant 0 : i32
    return %arg0, %c0_i32 : i32, i32
  }
  func.func @transform_1(%arg0: i32) -> (i32, i32) {
    %c0_i32 = arith.constant 0 : i32
    %c0_i32_0 = arith.constant 0 : i32
    %c0_i32_1 = arith.constant 0 : i32
    return %c0_i32, %c0_i32_0 : i32, i32
  }
  func.func @transform_2(%arg0: i32) -> (i32, i32) {
    %c0_i32 = arith.constant 0 : i32
    %c0_i32_0 = arith.constant 0 : i32
    %c0_i32_1 = arith.constant 0 : i32
    return %c0_i32, %c0_i32_0 : i32, i32
  }
  func.func @transform_3(%arg0: i32) -> (i32, i32) {
    %c0_i32 = arith.constant 0 : i32
    %c0_i32_0 = arith.constant 0 : i32
    return %arg0, %c0_i32 : i32, i32
  }
  func.func @transform_4(%arg0: i32) -> (i32, i32, i32) {
    %c0_i32 = arith.constant 0 : i32
    %c0_i32_0 = arith.constant 0 : i32
    %c0_i32_1 = arith.constant 0 : i32
    return %arg0, %c0_i32, %c0_i32_0 : i32, i32, i32
  }
  func.func @transform_5(%arg0: i32) -> (i32, i32, i32) {
    %c0_i32 = arith.constant 0 : i32
    %c0_i32_0 = arith.constant 0 : i32
    %c0_i32_1 = arith.constant 0 : i32
    return %arg0, %c0_i32, %c0_i32_0 : i32, i32, i32
  }
}

</mosaic_0001>

<llo_original>
// kernel: tpu_custom_call.1
$region0: #{tpu_custom_call.1}
  #allocation0 [shape = 'u32[]', space=smem, size = 0x4, offset = 0x4, fixed_abs, tag = 'smem constant byte address 0x4 - core index']
  #allocation1 [shape = 'u32[144,128]{1,0:T(1,128)}', space=vmem, size = 0x12000, scoped, tag = 'internal scratch']
  %s0 = inlined_call_operand.vmem [shape: f32[512,64], index: 0, kind: input, shape index: {}]
  %s1 = inlined_call_operand.vmem [shape: f32[128,64], index: 1, kind: input, shape index: {}]
  %s2 = inlined_call_operand.vmem [shape: f32[1,128], index: 2, kind: input, shape index: {}]
  %s3 = inlined_call_operand.vmem [shape: f32[512,64], index: 3, kind: output, shape index: {0}]
  %s4 = inlined_call_operand.hbm [shape: s32[2,1,256], index: 4, kind: output, shape index: {1}]
  %s5 = inlined_call_operand.hbm [shape: f32[2,1,64], index: 5, kind: output, shape index: {2}]
  %6 = xla_tuple %s3, %s4, %s5
  %s7 = sld [smem:[#allocation0]]
  $region61: #{tpu_custom_call.1} parent=0
    _
  %s9 = ssub.s32 1, %s7
  %s10 = scalar_select 0, %s9, %s7
  $region1: #{tpu_custom_call.1} parent=0
    #allocation2 [shape = 'u8[2048]{0}', space=vmem, size = 0x800, scoped, tag = 'output window, operand 1']
    #allocation3 [shape = 's32[2]{0}', space=sflag, size = 0x8, scoped, tag = 'scoped memory for tpu_custom_call.1']
    #allocation4 [shape = 'u8[1024]{0}', space=vmem, size = 0x400, scoped, tag = 'output window, operand 2']
    #allocation5 [shape = 's32[2]{0}', space=sflag, size = 0x8, scoped, tag = 'scoped memory for tpu_custom_call.1']
    %11 = vsyncpa [#allocation3], 0
    %s12 = scalar_lea.sflag [#allocation3], 1
    %13 = vsyncpa %s12, 0
    %14 = vsyncpa [#allocation5], 0
    %s15 = scalar_lea.sflag [#allocation5], 1
    %16 = vsyncpa %s15, 0
    loop: start=0, step=1, limit=4
    $region2: #{tpu_custom_call.1} parent=1 // loop_pre_header
      _
    $region3: #{tpu_custom_call.1} parent=1 // loop_header
      %s18 = sphi 0, %s22
      %p19 = scmp.ge.s32.totalorder %s18, 4
      %s28 = sphi 0, %s30
      %s31 = sphi 0, %s28
      %s32 = sphi 0, %s31
      %s48 = sphi 0, %s32
      %s52 = sphi 0, %s52
      %s54 = sphi 0, %s52
      %s55 = sphi 0, %s54
      %s69 = sphi 0, %s55
      %s73 = sphi 0, %s73
      %s75 = sphi 0, %s73
      %s76 = sphi 0, %s75
      %s90 = sphi 0, %s76
      %s96 = sphi 0, %s98
      %s99 = sphi 0, %s96
      %s100 = sphi 0, %s99
      %s116 = sphi 0, %s100
      %s122 = sphi 0, %s124
      %s125 = sphi 0, %s122
      %s126 = sphi 0, %s125
      %s142 = sphi 0, %s126
      %s148 = sphi 0, %s150
      %s151 = sphi 0, %s148
      %s152 = sphi 0, %s151
      %s168 = sphi 0, %s152
    $region4: #{tpu_custom_call.1} parent=1 // loop_header_branch
      %21 = sbr.rel (%p19) target = $region8
    $region5: #{tpu_custom_call.1} parent=1 // loop_body
      %s23 = ssub.s32 %s18, 1
      %s24 = ssub.s32 %s18, 2
      %s25 = sadd.s32 %s18, 1
      %s26 = ssub.s32 %s18, %s25
      %p27 = scmp.eq.s32.totalorder %s26, 0
      %s29 = sadd.s32 %s28, 1
      %s30 = scalar_select %p27, %s28, %s29
      %p33 = pneg %p27
      %p34 = scmp.eq.s32.totalorder %s18, 1
      %p35 = por %p33, %p34
      %p36 = scmp.ne.s32.totalorder %s28, %s31
      %p37 = scmp.eq.s32.totalorder %s18, 0
      %p38 = por %p36, %p37
      %p39 = scmp.ne.s32.totalorder %s28, %s31
      %p40 = scmp.eq.s32.totalorder %s23, 1
      %p41 = por %p39, %p40
      %p42 = scmp.ne.s32.totalorder %s31, %s32
      %p43 = scmp.eq.s32.totalorder %s23, 0
      %p44 = por %p42, %p43
      %p45 = scmp.ne.s32.totalorder %s31, %s32
      %p46 = scmp.eq.s32.totalorder %s24, 1
      %p47 = por %p45, %p46
      %p49 = scmp.ne.s32.totalorder %s32, %s48
      %p50 = scmp.eq.s32.totalorder %s24, 0
      %p51 = por %p49, %p50
      %s53 = sadd.s32 %s52, 1
      %p56 = scmp.eq.s32.totalorder %s18, 1
      %p57 = scmp.ne.s32.totalorder %s52, %s54
      %p58 = scmp.eq.s32.totalorder %s18, 0
      %p59 = por %p57, %p58
      %p60 = scmp.ne.s32.totalorder %s52, %s54
      %p61 = scmp.eq.s32.totalorder %s23, 1
      %p62 = por %p60, %p61
      %p63 = scmp.ne.s32.totalorder %s54, %s55
      %p64 = scmp.eq.s32.totalorder %s23, 0
      %p65 = por %p63, %p64
      %p66 = scmp.ne.s32.totalorder %s54, %s55
      %p67 = scmp.eq.s32.totalorder %s24, 1
      %p68 = por %p66, %p67
      %p70 = scmp.ne.s32.totalorder %s55, %s69
      %p71 = scmp.eq.s32.totalorder %s24, 0
      %p72 = por %p70, %p71
      %s74 = sadd.s32 %s73, 1
      %p77 = scmp.eq.s32.totalorder %s18, 1
      %p78 = scmp.ne.s32.totalorder %s73, %s75
      %p79 = scmp.eq.s32.totalorder %s18, 0
      %p80 = por %p78, %p79
      %p81 = scmp.ne.s32.totalorder %s73, %s75
      %p82 = scmp.eq.s32.totalorder %s23, 1
      %p83 = por %p81, %p82
      %p84 = scmp.ne.s32.totalorder %s75, %s76
      %p85 = scmp.eq.s32.totalorder %s23, 0
      %p86 = por %p84, %p85
      %p87 = scmp.ne.s32.totalorder %s75, %s76
      %p88 = scmp.eq.s32.totalorder %s24, 1
      %p89 = por %p87, %p88
      %p91 = scmp.ne.s32.totalorder %s76, %s90
      %p92 = scmp.eq.s32.totalorder %s24, 0
      %p93 = por %p91, %p92
      %s94 = ssub.s32 %s18, %s25
      %p95 = scmp.eq.s32.totalorder %s94, 0
      %s97 = sadd.s32 %s96, 1
      %s98 = scalar_select %p95, %s96, %s97
      %p101 = pneg %p95
      %p102 = scmp.eq.s32.totalorder %s18, 1
      %p103 = por %p101, %p102
      %p104 = scmp.ne.s32.totalorder %s96, %s99
      %p105 = scmp.eq.s32.totalorder %s18, 0
      %p106 = por %p104, %p105
      %p107 = scmp.ne.s32.totalorder %s96, %s99
      %p108 = scmp.eq.s32.totalorder %s23, 1
      %p109 = por %p107, %p108
      %p110 = scmp.ne.s32.totalorder %s99, %s100
      %p111 = scmp.eq.s32.totalorder %s23, 0
      %p112 = por %p110, %p111
      %p113 = scmp.ne.s32.totalorder %s99, %s100
      %p114 = scmp.eq.s32.totalorder %s24, 1
      %p115 = por %p113, %p114
      %p117 = scmp.ne.s32.totalorder %s100, %s116
      %p118 = scmp.eq.s32.totalorder %s24, 0
      %p119 = por %p117, %p118
      %s120 = ssub.s32 %s18, %s25
      %p121 = scmp.eq.s32.totalorder %s120, 0
      %s123 = sadd.s32 %s122, 1
      %s124 = scalar_select %p121, %s122, %s123
      %p127 = pneg %p121
      %p128 = scmp.eq.s32.totalorder %s18, 1
      %p129 = por %p127, %p128
      %p130 = scmp.ne.s32.totalorder %s122, %s125
      %p131 = scmp.eq.s32.totalorder %s18, 0
      %p132 = por %p130, %p131
      %p133 = scmp.ne.s32.totalorder %s122, %s125
      %p134 = scmp.eq.s32.totalorder %s23, 1
      %p135 = por %p133, %p134
      %p136 = scmp.ne.s32.totalorder %s125, %s126
      %p137 = scmp.eq.s32.totalorder %s23, 0
      %p138 = por %p136, %p137
      %p139 = scmp.ne.s32.totalorder %s125, %s126
      %p140 = scmp.eq.s32.totalorder %s24, 1
      %p141 = por %p139, %p140
      %p143 = scmp.ne.s32.totalorder %s126, %s142
      %p144 = scmp.eq.s32.totalorder %s24, 0
      %p145 = por %p143, %p144
      %s146 = ssub.s32 %s18, %s25
      %p147 = scmp.eq.s32.totalorder %s146, 0
      %s149 = sadd.s32 %s148, 1
      %s150 = scalar_select %p147, %s148, %s149
      %p153 = pneg %p147
      %p154 = scmp.eq.s32.totalorder %s18, 1
      %p155 = por %p153, %p154
      %p156 = scmp.ne.s32.totalorder %s148, %s151
      %p157 = scmp.eq.s32.totalorder %s18, 0
      %p158 = por %p156, %p157
      %p159 = scmp.ne.s32.totalorder %s148, %s151
      %p160 = scmp.eq.s32.totalorder %s23, 1
      %p161 = por %p159, %p160
      %p162 = scmp.ne.s32.totalorder %s151, %s152
      %p163 = scmp.eq.s32.totalorder %s23, 0
      %p164 = por %p162, %p163
      %p165 = scmp.ne.s32.totalorder %s151, %s152
      %p166 = scmp.eq.s32.totalorder %s24, 1
      %p167 = por %p165, %p166
      %p169 = scmp.ne.s32.totalorder %s152, %s168
      %p170 = scmp.eq.s32.totalorder %s24, 0
      %p171 = por %p169, %p170
      %p172 = scmp.le.s32.totalorder 1, %s18
      %p173 = scmp.lt.s32.totalorder %s18, 3
      %p174 = pnand %p172, %p173
      %p175 = pneg %p174
      // Predicated region
      $region9: #{tpu_custom_call.1} parent=5 // pred_check
        _
      $region10: #{tpu_custom_call.1} parent=5 // pred_check_branch
        %177 = sbr.rel (%p174) target = $region12
      $region11: #{tpu_custom_call.1} parent=5 // pred_region
        %s178 = ssub.s32 %s18, 1
        // Predicated region
        $region13: #{tpu_custom_call.1} parent=11 // pred_check
          %p179 = pneg %p65
        $region14: #{tpu_custom_call.1} parent=11 // pred_check_branch
          %181 = sbr.rel (%p179) target = $region16
        $region15: #{tpu_custom_call.1} parent=11 // pred_region
          _
        $region16: #{tpu_custom_call.1} parent=11 // pred_fallthru
          _
        // Predicated region
        $region17: #{tpu_custom_call.1} parent=11 // pred_check
          %p182 = pneg %p86
        $region18: #{tpu_custom_call.1} parent=11 // pred_check_branch
          %184 = sbr.rel (%p182) target = $region20
        $region19: #{tpu_custom_call.1} parent=11 // pred_region
          _
        $region20: #{tpu_custom_call.1} parent=11 // pred_fallthru
          _
      $region12: #{tpu_custom_call.1} parent=5 // pred_fallthru
        _
      %p185 = scmp.lt.s32.totalorder %s18, 2
      // Predicated region
      $region21: #{tpu_custom_call.1} parent=5 // pred_check
        %p186 = pneg %p185
      $region22: #{tpu_custom_call.1} parent=5 // pred_check_branch
        %188 = sbr.rel (%p186) target = $region24
      $region23: #{tpu_custom_call.1} parent=5 // pred_region
        // Predicated region
        $region25: #{tpu_custom_call.1} parent=23 // pred_check
          %p189 = pneg %p38
        $region26: #{tpu_custom_call.1} parent=23 // pred_check_branch
          %191 = sbr.rel (%p189) target = $region28
        $region27: #{tpu_custom_call.1} parent=23 // pred_region
          %s192 = smul.u32 32, %s18
          %p193 = scmp.lt.s32.totalorder %s192, 63
          %s194 = scalar_select %p193, %s192, 63
          %s195 = smul.addr %s194, 8
          %s196 = scalar_lea.vmem %s0, %s195
          %s197 = smul.u32 32, %s18
        $region28: #{tpu_custom_call.1} parent=23 // pred_fallthru
          _
      $region24: #{tpu_custom_call.1} parent=5 // pred_fallthru
        _
      %p198 = scmp.le.s32.totalorder 1, %s18
      %p199 = scmp.lt.s32.totalorder %s18, 3
      %p200 = pnand %p198, %p199
      %p201 = pneg %p200
      // Predicated region
      $region29: #{tpu_custom_call.1} parent=5 // pred_check
        _
      $region30: #{tpu_custom_call.1} parent=5 // pred_check_branch
        %203 = sbr.rel (%p200) target = $region32
      $region31: #{tpu_custom_call.1} parent=5 // pred_region
        %s204 = ssub.s32 %s18, 1
        %s205 = smul.u32 32, %s23
        %p206 = scmp.lt.s32.totalorder %s205, 63
        %s207 = scalar_select %p206, %s205, 63
        %s208 = smul.addr %s207, 8
        %s209 = scalar_lea.vmem %s0, %s208
        %p210 = pneg %p44
        %p211 = pneg %p41
        %p212 = pneg %p65
        %p213 = pneg %p62
        %p214 = pneg %p86
        %p215 = pneg %p83
        %p216 = pneg %p112
        %p217 = pneg %p109
        %s218 = smul.u32 32, %s23
        %p219 = scmp.lt.s32.totalorder %s218, 63
        %s220 = scalar_select %p219, %s218, 63
        %s221 = smul.addr %s220, 8
        %s222 = scalar_lea.vmem %s3, %s221
        %p223 = pneg %p138
        %p224 = pneg %p135
        %s225 = sand.u32 %s125, 1
        %s226 = scalar_lea.sflag [#allocation3], %s225
        %s227 = sand.u32 %s125, 1
        %s228 = smul.addr %s227, 2
        %s229 = scalar_lea.vmem [#allocation2], %s228
        %p230 = pneg %p164
        %p231 = pneg %p161
        %s232 = sand.u32 %s151, 1
        %s233 = scalar_lea.sflag [#allocation5], %s232
        %s234 = sand.u32 %s151, 1
        %s235 = scalar_lea.vmem [#allocation4], %s234
        %s236 = smul.u32 32, %s23
        %p237 = scmp.lt.s32.totalorder %s236, 63
        %s238 = scalar_select %p237, %s236, 63
        %s239 = smul.addr %s238, 8
        %s240 = scalar_lea.vmem %s0, %s239
        %s241 = smul.u32 32, %s23
        %s242 = smul.u32 32, %s23
        %p243 = scmp.lt.s32.totalorder %s242, 63
        %s244 = scalar_select %p243, %s242, 63
        %s245 = smul.addr %s244, 8
        %s246 = scalar_lea.vmem %s3, %s245
        %s247 = smul.u32 32, %s23
        %v248 = vld [vmem:[%s240] sm:$0xff]
        %v249 = vld [vmem:[%s240 + $0x8] sm:$0xff]
        %v250 = vld [vmem:[%s240 + $0x10] sm:$0xff]
        %v251 = vld [vmem:[%s240 + $0x18] sm:$0xff]
        %v252 = vld [vmem:[%s240 + $0x20] sm:$0xff]
        %v253 = vld [vmem:[%s240 + $0x28] sm:$0xff]
        %v254 = vld [vmem:[%s240 + $0x30] sm:$0xff]
        %v255 = vld [vmem:[%s240 + $0x38] sm:$0xff]
        %v256 = vld [vmem:[%s240 + $0x40] sm:$0xff]
        %v257 = vld [vmem:[%s240 + $0x48] sm:$0xff]
        %v258 = vld [vmem:[%s240 + $0x50] sm:$0xff]
        %v259 = vld [vmem:[%s240 + $0x58] sm:$0xff]
        %v260 = vld [vmem:[%s240 + $0x60] sm:$0xff]
        %v261 = vld [vmem:[%s240 + $0x68] sm:$0xff]
        %v262 = vld [vmem:[%s240 + $0x70] sm:$0xff]
        %v263 = vld [vmem:[%s240 + $0x78] sm:$0xff]
        %v264 = vld [vmem:[%s240 + $0x80] sm:$0xff]
        %v265 = vld [vmem:[%s240 + $0x88] sm:$0xff]
        %v266 = vld [vmem:[%s240 + $0x90] sm:$0xff]
        %v267 = vld [vmem:[%s240 + $0x98] sm:$0xff]
        %v268 = vld [vmem:[%s240 + $0xa0] sm:$0xff]
        %v269 = vld [vmem:[%s240 + $0xa8] sm:$0xff]
        %v270 = vld [vmem:[%s240 + $0xb0] sm:$0xff]
        %v271 = vld [vmem:[%s240 + $0xb8] sm:$0xff]
        %v272 = vld [vmem:[%s240 + $0xc0] sm:$0xff]
        %v273 = vld [vmem:[%s240 + $0xc8] sm:$0xff]
        %v274 = vld [vmem:[%s240 + $0xd0] sm:$0xff]
        %v275 = vld [vmem:[%s240 + $0xd8] sm:$0xff]
        %v276 = vld [vmem:[%s240 + $0xe0] sm:$0xff]
        %v277 = vld [vmem:[%s240 + $0xe8] sm:$0xff]
        %v278 = vld [vmem:[%s240 + $0xf0] sm:$0xff]
        %v279 = vld [vmem:[%s240 + $0xf8] sm:$0xff]
        %v280 = vld [vmem:[%s1] sm:$0xff]
        %v281 = vld [vmem:[%s1 + $0x8] sm:$0xff]
        %v282 = vld [vmem:[%s1 + $0x10] sm:$0xff]
        %v283 = vld [vmem:[%s1 + $0x18] sm:$0xff]
        %v284 = vld [vmem:[%s1 + $0x20] sm:$0xff]
        %v285 = vld [vmem:[%s1 + $0x28] sm:$0xff]
        %v286 = vld [vmem:[%s1 + $0x30] sm:$0xff]
        %v287 = vld [vmem:[%s1 + $0x38] sm:$0xff]
        %v288 = vld [vmem:[%s1 + $0x40] sm:$0xff]
        %v289 = vld [vmem:[%s1 + $0x48] sm:$0xff]
        %v290 = vld [vmem:[%s1 + $0x50] sm:$0xff]
        %v291 = vld [vmem:[%s1 + $0x58] sm:$0xff]
        %v292 = vld [vmem:[%s1 + $0x60] sm:$0xff]
        %v293 = vld [vmem:[%s1 + $0x68] sm:$0xff]
        %v294 = vld [vmem:[%s1 + $0x70] sm:$0xff]
        %v295 = vld [vmem:[%s1 + $0x78] sm:$0xff]
        %vm296 = vcmask 523264
        %v298 = vsel %vm296, %v248, 0
        %v301 = vsel %vm296, %v249, 0
        %v304 = vsel %vm296, %v250, 0
        %v307 = vsel %vm296, %v251, 0
        %v310 = vsel %vm296, %v252, 0
        %v313 = vsel %vm296, %v253, 0
        %v316 = vsel %vm296, %v254, 0
        %v319 = vsel %vm296, %v255, 0
        %v322 = vsel %vm296, %v256, 0
        %v325 = vsel %vm296, %v257, 0
        %v328 = vsel %vm296, %v258, 0
        %v331 = vsel %vm296, %v259, 0
        %v334 = vsel %vm296, %v260, 0
        %v337 = vsel %vm296, %v261, 0
        %v340 = vsel %vm296, %v262, 0
        %v343 = vsel %vm296, %v263, 0
        %v346 = vsel %vm296, %v264, 0
        %v349 = vsel %vm296, %v265, 0
        %v352 = vsel %vm296, %v266, 0
        %v355 = vsel %vm296, %v267, 0
        %v358 = vsel %vm296, %v268, 0
        %v361 = vsel %vm296, %v269, 0
        %v364 = vsel %vm296, %v270, 0
        %v367 = vsel %vm296, %v271, 0
        %v370 = vsel %vm296, %v272, 0
        %v373 = vsel %vm296, %v273, 0
        %v376 = vsel %vm296, %v274, 0
        %v379 = vsel %vm296, %v275, 0
        %v382 = vsel %vm296, %v276, 0
        %v385 = vsel %vm296, %v277, 0
        %v388 = vsel %vm296, %v278, 0
        %v391 = vsel %vm296, %v279, 0
        %v394 = vsel %vm296, %v280, 0
        %v397 = vsel %vm296, %v281, 0
        %v400 = vsel %vm296, %v282, 0
        %v403 = vsel %vm296, %v283, 0
        %v406 = vsel %vm296, %v284, 0
        %v409 = vsel %vm296, %v285, 0
        %v412 = vsel %vm296, %v286, 0
        %v415 = vsel %vm296, %v287, 0
        %v418 = vsel %vm296, %v288, 0
        %v421 = vsel %vm296, %v289, 0
        %v424 = vsel %vm296, %v290, 0
        %v427 = vsel %vm296, %v291, 0
        %v430 = vsel %vm296, %v292, 0
        %v433 = vsel %vm296, %v293, 0
        %v436 = vsel %vm296, %v294, 0
        %v439 = vsel %vm296, %v295, 0
        %441 = vmatprep.subr.mxu0 0.0
        %442 = vmatpush1.xpose.msra.mxu0 %v394
        %443 = vmatprep.subr.mxu0 0.0
        %444 = vmatpush1.xpose.msra.mxu0 %v397
        %445 = vmatprep.subr.mxu0 0.0
        %446 = vmatpush1.xpose.msra.mxu0 %v400
        %447 = vmatprep.subr.mxu0 0.0
        %448 = vmatpush1.xpose.msra.mxu0 %v403
        %449 = vmatprep.subr.mxu0 0.0
        %450 = vmatpush1.xpose.msra.mxu0 %v406
        %451 = vmatprep.subr.mxu0 0.0
        %452 = vmatpush1.xpose.msra.mxu0 %v409
        %453 = vmatprep.subr.mxu0 0.0
        %454 = vmatpush1.xpose.msra.mxu0 %v412
        %455 = vmatprep.subr.mxu0 0.0
        %456 = vmatpush1.xpose.msra.mxu0 %v415
        %457 = vmatprep.subr.mxu0 0.0
        %458 = vmatpush1.xpose.msra.mxu0 %v418
        %459 = vmatprep.subr.mxu0 0.0
        %460 = vmatpush1.xpose.msra.mxu0 %v421
        %461 = vmatprep.subr.mxu0 0.0
        %462 = vmatpush1.xpose.msra.mxu0 %v424
        %463 = vmatprep.subr.mxu0 0.0
        %464 = vmatpush1.xpose.msra.mxu0 %v427
        %465 = vmatprep.subr.mxu0 0.0
        %466 = vmatpush1.xpose.msra.mxu0 %v430
        %467 = vmatprep.subr.mxu0 0.0
        %468 = vmatpush1.xpose.msra.mxu0 %v433
        %469 = vmatprep.subr.mxu0 0.0
        %470 = vmatpush1.xpose.msra.mxu0 %v436
        %471 = vmatprep.subr.mxu0 0.0
        %472 = vmatpush1.xpose.msra.mxu0 %v439
        %473 = vmatprep.subr.mxu0 0.0
        %474 = vmatpush1.xpose.msra.mxu0 0.0
        %475 = vmatprep.subr.mxu0 0.0
        %476 = vmatpush1.xpose.msra.mxu0 0.0
        %477 = vmatprep.subr.mxu0 0.0
        %478 = vmatpush1.xpose.msra.mxu0 0.0
        %479 = vmatprep.subr.mxu0 0.0
        %480 = vmatpush1.xpose.msra.mxu0 0.0
        %481 = vmatprep.subr.mxu0 0.0
        %482 = vmatpush1.xpose.msra.mxu0 0.0
        %483 = vmatprep.subr.mxu0 0.0
        %484 = vmatpush1.xpose.msra.mxu0 0.0
        %485 = vmatprep.subr.mxu0 0.0
        %486 = vmatpush1.xpose.msra.mxu0 0.0
        %487 = vmatprep.subr.mxu0 0.0
        %488 = vmatpush1.xpose.msra.mxu0 0.0
        %489 = vmatprep.subr.mxu0 0.0
        %490 = vmatpush1.xpose.msra.mxu0 0.0
        %491 = vmatprep.subr.mxu0 0.0
        %492 = vmatpush1.xpose.msra.mxu0 0.0
        %493 = vmatprep.subr.mxu0 0.0
        %494 = vmatpush1.xpose.msra.mxu0 0.0
        %495 = vmatprep.subr.mxu0 0.0
        %496 = vmatpush1.xpose.msra.mxu0 0.0
        %497 = vmatprep.subr.mxu0 0.0
        %498 = vmatpush1.xpose.msra.mxu0 0.0
        %499 = vmatprep.subr.mxu0 0.0
        %500 = vmatpush1.xpose.msra.mxu0 0.0
        %501 = vmatprep.subr.mxu0 0.0
        %502 = vmatpush1.xpose.msra.mxu0 0.0
        %503 = vmatprep.subr.mxu0 0.0
        %504 = vmatpush1.xpose.msra.mxu0 0.0
        %505 = vmatprep.mubr.f32.mxu0 0.0
        %506 = vmatmul.mubr.f32.gmra.mrb[0].mxu0 %v298
        %v507 = vpop.f32.mrb[0].mxu0
        %v508 = vadd.f32 0.0, %v507
        %v509 = vpop.f32.mrb[0].mxu0
        %510 = vmatprep.mubr.f32.mxu0 0.0
        %511 = vmatmul.mubr.f32.gmra.mrb[0].mxu0 %v301
        %v512 = vpop.f32.mrb[0].mxu0
        %v513 = vadd.f32 0.0, %v512
        %v514 = vpop.f32.mrb[0].mxu0
        %515 = vmatprep.mubr.f32.mxu0 0.0
        %516 = vmatmul.mubr.f32.gmra.mrb[0].mxu0 %v304
        %v517 = vpop.f32.mrb[0].mxu0
        %v518 = vadd.f32 0.0, %v517
        %v519 = vpop.f32.mrb[0].mxu0
        %520 = vmatprep.mubr.f32.mxu0 0.0
        %521 = vmatmul.mubr.f32.gmra.mrb[0].mxu0 %v307
        %v522 = vpop.f32.mrb[0].mxu0
        %v523 = vadd.f32 0.0, %v522
        %v524 = vpop.f32.mrb[0].mxu0
        %525 = vmatprep.mubr.f32.mxu0 0.0
        %526 = vmatmul.mubr.f32.gmra.mrb[0].mxu0 %v310
        %v527 = vpop.f32.mrb[0].mxu0
        %v528 = vadd.f32 0.0, %v527
        %v529 = vpop.f32.mrb[0].mxu0
        %530 = vmatprep.mubr.f32.mxu0 0.0
        %531 = vmatmul.mubr.f32.gmra.mrb[0].mxu0 %v313
        %v532 = vpop.f32.mrb[0].mxu0
        %v533 = vadd.f32 0.0, %v532
        %v534 = vpop.f32.mrb[0].mxu0
        %535 = vmatprep.mubr.f32.mxu0 0.0
        %536 = vmatmul.mubr.f32.gmra.mrb[0].mxu0 %v316
        %v537 = vpop.f32.mrb[0].mxu0
        %v538 = vadd.f32 0.0, %v537
        %v539 = vpop.f32.mrb[0].mxu0
        %540 = vmatprep.mubr.f32.mxu0 0.0
        %541 = vmatmul.mubr.f32.gmra.mrb[0].mxu0 %v319
        %v542 = vpop.f32.mrb[0].mxu0
        %v543 = vadd.f32 0.0, %v542
        %v544 = vpop.f32.mrb[0].mxu0
        %545 = vmatprep.mubr.f32.mxu0 0.0
        %546 = vmatmul.mubr.f32.gmra.mrb[0].mxu0 %v322
        %v547 = vpop.f32.mrb[0].mxu0
        %v548 = vadd.f32 0.0, %v547
        %v549 = vpop.f32.mrb[0].mxu0
        %550 = vmatprep.mubr.f32.mxu0 0.0
        %551 = vmatmul.mubr.f32.gmra.mrb[0].mxu0 %v325
        %v552 = vpop.f32.mrb[0].mxu0
        %v553 = vadd.f32 0.0, %v552
        %v554 = vpop.f32.mrb[0].mxu0
        %555 = vmatprep.mubr.f32.mxu0 0.0
        %556 = vmatmul.mubr.f32.gmra.mrb[0].mxu0 %v328
        %v557 = vpop.f32.mrb[0].mxu0
        %v558 = vadd.f32 0.0, %v557
        %v559 = vpop.f32.mrb[0].mxu0
        %560 = vmatprep.mubr.f32.mxu0 0.0
        %561 = vmatmul.mubr.f32.gmra.mrb[0].mxu0 %v331
        %v562 = vpop.f32.mrb[0].mxu0
        %v563 = vadd.f32 0.0, %v562
        %v564 = vpop.f32.mrb[0].mxu0
        %565 = vmatprep.mubr.f32.mxu0 0.0
        %566 = vmatmul.mubr.f32.gmra.mrb[0].mxu0 %v334
        %v567 = vpop.f32.mrb[0].mxu0
        %v568 = vadd.f32 0.0, %v567
        %v569 = vpop.f32.mrb[0].mxu0
        %570 = vmatprep.mubr.f32.mxu0 0.0
        %571 = vmatmul.mubr.f32.gmra.mrb[0].mxu0 %v337
        %v572 = vpop.f32.mrb[0].mxu0
        %v573 = vadd.f32 0.0, %v572
        %v574 = vpop.f32.mrb[0].mxu0
        %575 = vmatprep.mubr.f32.mxu0 0.0
        %576 = vmatmul.mubr.f32.gmra.mrb[0].mxu0 %v340
        %v577 = vpop.f32.mrb[0].mxu0
        %v578 = vadd.f32 0.0, %v577
        %v579 = vpop.f32.mrb[0].mxu0
        %580 = vmatprep.mubr.f32.mxu0 0.0
        %581 = vmatmul.mubr.f32.gmra.mrb[0].mxu0 %v343
        %v582 = vpop.f32.mrb[0].mxu0
        %v583 = vadd.f32 0.0, %v582
        %v584 = vpop.f32.mrb[0].mxu0
        %585 = vmatprep.mubr.f32.mxu0 0.0
        %586 = vmatmul.mubr.f32.gmra.mrb[0].mxu0 %v346
        %v587 = vpop.f32.mrb[0].mxu0
        %v588 = vadd.f32 0.0, %v587
        %v589 = vpop.f32.mrb[0].mxu0
        %590 = vmatprep.mubr.f32.mxu0 0.0
        %591 = vmatmul.mubr.f32.gmra.mrb[0].mxu0 %v349
        %v592 = vpop.f32.mrb[0].mxu0
        %v593 = vadd.f32 0.0, %v592
        %v594 = vpop.f32.mrb[0].mxu0
        %595 = vmatprep.mubr.f32.mxu0 0.0
        %596 = vmatmul.mubr.f32.gmra.mrb[0].mxu0 %v352
        %v597 = vpop.f32.mrb[0].mxu0
        %v598 = vadd.f32 0.0, %v597
        %v599 = vpop.f32.mrb[0].mxu0
        %600 = vmatprep.mubr.f32.mxu0 0.0
        %601 = vmatmul.mubr.f32.gmra.mrb[0].mxu0 %v355
        %v602 = vpop.f32.mrb[0].mxu0
        %v603 = vadd.f32 0.0, %v602
        %v604 = vpop.f32.mrb[0].mxu0
        %605 = vmatprep.mubr.f32.mxu0 0.0
        %606 = vmatmul.mubr.f32.gmra.mrb[0].mxu0 %v358
        %v607 = vpop.f32.mrb[0].mxu0
        %v608 = vadd.f32 0.0, %v607
        %v609 = vpop.f32.mrb[0].mxu0
        %610 = vmatprep.mubr.f32.mxu0 0.0
        %611 = vmatmul.mubr.f32.gmra.mrb[0].mxu0 %v361
        %v612 = vpop.f32.mrb[0].mxu0
        %v613 = vadd.f32 0.0, %v612
        %v614 = vpop.f32.mrb[0].mxu0
        %615 = vmatprep.mubr.f32.mxu0 0.0
        %616 = vmatmul.mubr.f32.gmra.mrb[0].mxu0 %v364
        %v617 = vpop.f32.mrb[0].mxu0
        %v618 = vadd.f32 0.0, %v617
        %v619 = vpop.f32.mrb[0].mxu0
        %620 = vmatprep.mubr.f32.mxu0 0.0
        %621 = vmatmul.mubr.f32.gmra.mrb[0].mxu0 %v367
        %v622 = vpop.f32.mrb[0].mxu0
        %v623 = vadd.f32 0.0, %v622
        %v624 = vpop.f32.mrb[0].mxu0
        %625 = vmatprep.mubr.f32.mxu0 0.0
        %626 = vmatmul.mubr.f32.gmra.mrb[0].mxu0 %v370
        %v627 = vpop.f32.mrb[0].mxu0
        %v628 = vadd.f32 0.0, %v627
        %v629 = vpop.f32.mrb[0].mxu0
        %630 = vmatprep.mubr.f32.mxu0 0.0
        %631 = vmatmul.mubr.f32.gmra.mrb[0].mxu0 %v373
        %v632 = vpop.f32.mrb[0].mxu0
        %v633 = vadd.f32 0.0, %v632
        %v634 = vpop.f32.mrb[0].mxu0
        %635 = vmatprep.mubr.f32.mxu0 0.0
        %636 = vmatmul.mubr.f32.gmra.mrb[0].mxu0 %v376
        %v637 = vpop.f32.mrb[0].mxu0
        %v638 = vadd.f32 0.0, %v637
        %v639 = vpop.f32.mrb[0].mxu0
        %640 = vmatprep.mubr.f32.mxu0 0.0
        %641 = vmatmul.mubr.f32.gmra.mrb[0].mxu0 %v379
        %v642 = vpop.f32.mrb[0].mxu0
        %v643 = vadd.f32 0.0, %v642
        %v644 = vpop.f32.mrb[0].mxu0
        %645 = vmatprep.mubr.f32.mxu0 0.0
        %646 = vmatmul.mubr.f32.gmra.mrb[0].mxu0 %v382
        %v647 = vpop.f32.mrb[0].mxu0
        %v648 = vadd.f32 0.0, %v647
        %v649 = vpop.f32.mrb[0].mxu0
        %650 = vmatprep.mubr.f32.mxu0 0.0
        %651 = vmatmul.mubr.f32.gmra.mrb[0].mxu0 %v385
        %v652 = vpop.f32.mrb[0].mxu0
        %v653 = vadd.f32 0.0, %v652
        %v654 = vpop.f32.mrb[0].mxu0
        %655 = vmatprep.mubr.f32.mxu0 0.0
        %656 = vmatmul.mubr.f32.gmra.mrb[0].mxu0 %v388
        %v657 = vpop.f32.mrb[0].mxu0
        %v658 = vadd.f32 0.0, %v657
        %v659 = vpop.f32.mrb[0].mxu0
        %660 = vmatprep.mubr.f32.mxu0 0.0
        %661 = vmatmul.mubr.f32.gmra.mrb[0].mxu0 %v391
        %v662 = vpop.f32.mrb[0].mxu0
        %v663 = vadd.f32 0.0, %v662
        %v664 = vpop.f32.mrb[0].mxu0
        %665 = vdwg.mxu0
        %v666 = vld [vmem:[%s2] sm:$0x1]
        %v668 = vlaneseq
        %v669 = vshrl.u32 %v668, 7
        %v670 = vsub.s32 0, %v669
        %v671 = vrot.slane %v666, %v670
        %v673 = vsub.f32 %v671, %v508
        %v674 = vsub.f32 %v671, %v513
        %v675 = vsub.f32 %v671, %v518
        %v676 = vsub.f32 %v671, %v523
        %v677 = vsub.f32 %v671, %v528
        %v678 = vsub.f32 %v671, %v533
        %v679 = vsub.f32 %v671, %v538
        %v680 = vsub.f32 %v671, %v543
        %v681 = vsub.f32 %v671, %v548
        %v682 = vsub.f32 %v671, %v553
        %v683 = vsub.f32 %v671, %v558
        %v684 = vsub.f32 %v671, %v563
        %v685 = vsub.f32 %v671, %v568
        %v686 = vsub.f32 %v671, %v573
        %v687 = vsub.f32 %v671, %v578
        %v688 = vsub.f32 %v671, %v583
        %v689 = vsub.f32 %v671, %v588
        %v690 = vsub.f32 %v671, %v593
        %v691 = vsub.f32 %v671, %v598
        %v692 = vsub.f32 %v671, %v603
        %v693 = vsub.f32 %v671, %v608
        %v694 = vsub.f32 %v671, %v613
        %v695 = vsub.f32 %v671, %v618
        %v696 = vsub.f32 %v671, %v623
        %v697 = vsub.f32 %v671, %v628
        %v698 = vsub.f32 %v671, %v633
        %v699 = vsub.f32 %v671, %v638
        %v700 = vsub.f32 %v671, %v643
        %v701 = vsub.f32 %v671, %v648
        %v702 = vsub.f32 %v671, %v653
        %v703 = vsub.f32 %v671, %v658
        %v704 = vsub.f32 %v671, %v663
        %705 = vmin.xlane.f32.xlu0 %v673
        %v706 = vpop.xlane.xlu0 %705
        %707 = vmin.xlane.f32.xlu0 %v674
        %v708 = vpop.xlane.xlu0 %707
        %709 = vmin.xlane.f32.xlu0 %v675
        %v710 = vpop.xlane.xlu0 %709
        %711 = vmin.xlane.f32.xlu0 %v676
        %v712 = vpop.xlane.xlu0 %711
        %713 = vmin.xlane.f32.xlu0 %v677
        %v714 = vpop.xlane.xlu0 %713
        %715 = vmin.xlane.f32.xlu0 %v678
        %v716 = vpop.xlane.xlu0 %715
        %717 = vmin.xlane.f32.xlu0 %v679
        %v718 = vpop.xlane.xlu0 %717
        %719 = vmin.xlane.f32.xlu0 %v680
        %v720 = vpop.xlane.xlu0 %719
        %721 = vmin.xlane.f32.xlu0 %v681
        %v722 = vpop.xlane.xlu0 %721
        %723 = vmin.xlane.f32.xlu0 %v682
        %v724 = vpop.xlane.xlu0 %723
        %725 = vmin.xlane.f32.xlu0 %v683
        %v726 = vpop.xlane.xlu0 %725
        %727 = vmin.xlane.f32.xlu0 %v684
        %v728 = vpop.xlane.xlu0 %727
        %729 = vmin.xlane.f32.xlu0 %v685
        %v730 = vpop.xlane.xlu0 %729
        %731 = vmin.xlane.f32.xlu0 %v686
        %v732 = vpop.xlane.xlu0 %731
        %733 = vmin.xlane.f32.xlu0 %v687
        %v734 = vpop.xlane.xlu0 %733
        %735 = vmin.xlane.f32.xlu0 %v688
        %v736 = vpop.xlane.xlu0 %735
        %737 = vmin.xlane.f32.xlu0 %v689
        %v738 = vpop.xlane.xlu0 %737
        %739 = vmin.xlane.f32.xlu0 %v690
        %v740 = vpop.xlane.xlu0 %739
        %741 = vmin.xlane.f32.xlu0 %v691
        %v742 = vpop.xlane.xlu0 %741
        %743 = vmin.xlane.f32.xlu0 %v692
        %v744 = vpop.xlane.xlu0 %743
        %745 = vmin.xlane.f32.xlu0 %v693
        %v746 = vpop.xlane.xlu0 %745
        %747 = vmin.xlane.f32.xlu0 %v694
        %v748 = vpop.xlane.xlu0 %747
        %749 = vmin.xlane.f32.xlu0 %v695
        %v750 = vpop.xlane.xlu0 %749
        %751 = vmin.xlane.f32.xlu0 %v696
        %v752 = vpop.xlane.xlu0 %751
        %753 = vmin.xlane.f32.xlu0 %v697
        %v754 = vpop.xlane.xlu0 %753
        %755 = vmin.xlane.f32.xlu0 %v698
        %v756 = vpop.xlane.xlu0 %755
        %757 = vmin.xlane.f32.xlu0 %v699
        %v758 = vpop.xlane.xlu0 %757
        %759 = vmin.xlane.f32.xlu0 %v700
        %v760 = vpop.xlane.xlu0 %759
        %761 = vmin.xlane.f32.xlu0 %v701
        %v762 = vpop.xlane.xlu0 %761
        %763 = vmin.xlane.f32.xlu0 %v702
        %v764 = vpop.xlane.xlu0 %763
        %765 = vmin.xlane.f32.xlu0 %v703
        %v766 = vpop.xlane.xlu0 %765
        %767 = vmin.xlane.f32.xlu0 %v704
        %v768 = vpop.xlane.xlu0 %767
        %v769 = vlaneseq
        %v770 = vand.u32 %v769, 127
        %vm771 = vcmp.eq.f32.partialorder %v673, %v706
        %vm772 = vcmp.eq.f32.partialorder %v674, %v708
        %vm773 = vcmp.eq.f32.partialorder %v675, %v710
        %vm774 = vcmp.eq.f32.partialorder %v676, %v712
        %vm775 = vcmp.eq.f32.partialorder %v677, %v714
        %vm776 = vcmp.eq.f32.partialorder %v678, %v716
        %vm777 = vcmp.eq.f32.partialorder %v679, %v718
        %vm778 = vcmp.eq.f32.partialorder %v680, %v720
        %vm779 = vcmp.eq.f32.partialorder %v681, %v722
        %vm780 = vcmp.eq.f32.partialorder %v682, %v724
        %vm781 = vcmp.eq.f32.partialorder %v683, %v726
        %vm782 = vcmp.eq.f32.partialorder %v684, %v728
        %vm783 = vcmp.eq.f32.partialorder %v685, %v730
        %vm784 = vcmp.eq.f32.partialorder %v686, %v732
        %vm785 = vcmp.eq.f32.partialorder %v687, %v734
        %vm786 = vcmp.eq.f32.partialorder %v688, %v736
        %vm787 = vcmp.eq.f32.partialorder %v689, %v738
        %vm788 = vcmp.eq.f32.partialorder %v690, %v740
        %vm789 = vcmp.eq.f32.partialorder %v691, %v742
        %vm790 = vcmp.eq.f32.partialorder %v692, %v744
        %vm791 = vcmp.eq.f32.partialorder %v693, %v746
        %vm792 = vcmp.eq.f32.partialorder %v694, %v748
        %vm793 = vcmp.eq.f32.partialorder %v695, %v750
        %vm794 = vcmp.eq.f32.partialorder %v696, %v752
        %vm795 = vcmp.eq.f32.partialorder %v697, %v754
        %vm796 = vcmp.eq.f32.partialorder %v698, %v756
        %vm797 = vcmp.eq.f32.partialorder %v699, %v758
        %vm798 = vcmp.eq.f32.partialorder %v700, %v760
        %vm799 = vcmp.eq.f32.partialorder %v701, %v762
        %vm800 = vcmp.eq.f32.partialorder %v702, %v764
        %vm801 = vcmp.eq.f32.partialorder %v703, %v766
        %vm802 = vcmp.eq.f32.partialorder %v704, %v768
        %v803 = vsel %vm771, %v770, 128
        %v804 = vsel %vm772, %v770, 128
        %v805 = vsel %vm773, %v770, 128
        %v806 = vsel %vm774, %v770, 128
        %v807 = vsel %vm775, %v770, 128
        %v808 = vsel %vm776, %v770, 128
        %v809 = vsel %vm777, %v770, 128
        %v810 = vsel %vm778, %v770, 128
        %v811 = vsel %vm779, %v770, 128
        %v812 = vsel %vm780, %v770, 128
        %v813 = vsel %vm781, %v770, 128
        %v814 = vsel %vm782, %v770, 128
        %v815 = vsel %vm783, %v770, 128
        %v816 = vsel %vm784, %v770, 128
        %v817 = vsel %vm785, %v770, 128
        %v818 = vsel %vm786, %v770, 128
        %v819 = vsel %vm787, %v770, 128
        %v820 = vsel %vm788, %v770, 128
        %v821 = vsel %vm789, %v770, 128
        %v822 = vsel %vm790, %v770, 128
        %v823 = vsel %vm791, %v770, 128
        %v824 = vsel %vm792, %v770, 128
        %v825 = vsel %vm793, %v770, 128
        %v826 = vsel %vm794, %v770, 128
        %v827 = vsel %vm795, %v770, 128
        %v828 = vsel %vm796, %v770, 128
        %v829 = vsel %vm797, %v770, 128
        %v830 = vsel %vm798, %v770, 128
        %v831 = vsel %vm799, %v770, 128
        %v832 = vsel %vm800, %v770, 128
        %v833 = vsel %vm801, %v770, 128
        %v834 = vsel %vm802, %v770, 128
        %v835 = vand.u32 %v803, 65535
        %v836 = vshra.s32 %v803, 16
        %v837 = vcvt.s32.f32 %v835
        %v838 = vcvt.s32.f32 %v836
        %839 = vmin.xlane.f32.xlu0 %v838
        %v840 = vpop.xlane.xlu0 %839
        %vm841 = vcmp.eq.f32.partialorder %v838, %v840
        %v842 = vsel %vm841, %v837, inf
        %843 = vmin.xlane.f32.xlu0 %v842
        %v844 = vpop.xlane.xlu0 %843
        %v845 = vcvt.f32.s32 %v844
        %v846 = vcvt.f32.s32 %v840
        %v847 = vshll.u32 %v846, 16
        %v848 = vadd.s32 %v847, %v845
        %v849 = vand.u32 %v804, 65535
        %v850 = vshra.s32 %v804, 16
        %v851 = vcvt.s32.f32 %v849
        %v852 = vcvt.s32.f32 %v850
        %853 = vmin.xlane.f32.xlu0 %v852
        %v854 = vpop.xlane.xlu0 %853
        %vm855 = vcmp.eq.f32.partialorder %v852, %v854
        %v856 = vsel %vm855, %v851, inf
        %857 = vmin.xlane.f32.xlu0 %v856
        %v858 = vpop.xlane.xlu0 %857
        %v859 = vcvt.f32.s32 %v858
        %v860 = vcvt.f32.s32 %v854
        %v861 = vshll.u32 %v860, 16
        %v862 = vadd.s32 %v861, %v859
        %v863 = vand.u32 %v805, 65535
        %v864 = vshra.s32 %v805, 16
        %v865 = vcvt.s32.f32 %v863
        %v866 = vcvt.s32.f32 %v864
        %867 = vmin.xlane.f32.xlu0 %v866
        %v868 = vpop.xlane.xlu0 %867
        %vm869 = vcmp.eq.f32.partialorder %v866, %v868
        %v870 = vsel %vm869, %v865, inf
        %871 = vmin.xlane.f32.xlu0 %v870
        %v872 = vpop.xlane.xlu0 %871
        %v873 = vcvt.f32.s32 %v872
        %v874 = vcvt.f32.s32 %v868
        %v875 = vshll.u32 %v874, 16
        %v876 = vadd.s32 %v875, %v873
        %v877 = vand.u32 %v806, 65535
        %v878 = vshra.s32 %v806, 16
        %v879 = vcvt.s32.f32 %v877
        %v880 = vcvt.s32.f32 %v878
        %881 = vmin.xlane.f32.xlu0 %v880
        %v882 = vpop.xlane.xlu0 %881
        %vm883 = vcmp.eq.f32.partialorder %v880, %v882
        %v884 = vsel %vm883, %v879, inf
        %885 = vmin.xlane.f32.xlu0 %v884
        %v886 = vpop.xlane.xlu0 %885
        %v887 = vcvt.f32.s32 %v886
        %v888 = vcvt.f32.s32 %v882
        %v889 = vshll.u32 %v888, 16
        %v890 = vadd.s32 %v889, %v887
        %v891 = vand.u32 %v807, 65535
        %v892 = vshra.s32 %v807, 16
        %v893 = vcvt.s32.f32 %v891
        %v894 = vcvt.s32.f32 %v892
        %895 = vmin.xlane.f32.xlu0 %v894
        %v896 = vpop.xlane.xlu0 %895
        %vm897 = vcmp.eq.f32.partialorder %v894, %v896
        %v898 = vsel %vm897, %v893, inf
        %899 = vmin.xlane.f32.xlu0 %v898
        %v900 = vpop.xlane.xlu0 %899
        %v901 = vcvt.f32.s32 %v900
        %v902 = vcvt.f32.s32 %v896
        %v903 = vshll.u32 %v902, 16
        %v904 = vadd.s32 %v903, %v901
        %v905 = vand.u32 %v808, 65535
        %v906 = vshra.s32 %v808, 16
        %v907 = vcvt.s32.f32 %v905
        %v908 = vcvt.s32.f32 %v906
        %909 = vmin.xlane.f32.xlu0 %v908
        %v910 = vpop.xlane.xlu0 %909
        %vm911 = vcmp.eq.f32.partialorder %v908, %v910
        %v912 = vsel %vm911, %v907, inf
        %913 = vmin.xlane.f32.xlu0 %v912
        %v914 = vpop.xlane.xlu0 %913
        %v915 = vcvt.f32.s32 %v914
        %v916 = vcvt.f32.s32 %v910
        %v917 = vshll.u32 %v916, 16
        %v918 = vadd.s32 %v917, %v915
        %v919 = vand.u32 %v809, 65535
        %v920 = vshra.s32 %v809, 16
        %v921 = vcvt.s32.f32 %v919
        %v922 = vcvt.s32.f32 %v920
        %923 = vmin.xlane.f32.xlu0 %v922
        %v924 = vpop.xlane.xlu0 %923
        %vm925 = vcmp.eq.f32.partialorder %v922, %v924
        %v926 = vsel %vm925, %v921, inf
        %927 = vmin.xlane.f32.xlu0 %v926
        %v928 = vpop.xlane.xlu0 %927
        %v929 = vcvt.f32.s32 %v928
        %v930 = vcvt.f32.s32 %v924
        %v931 = vshll.u32 %v930, 16
        %v932 = vadd.s32 %v931, %v929
        %v933 = vand.u32 %v810, 65535
        %v934 = vshra.s32 %v810, 16
        %v935 = vcvt.s32.f32 %v933
        %v936 = vcvt.s32.f32 %v934
        %937 = vmin.xlane.f32.xlu0 %v936
        %v938 = vpop.xlane.xlu0 %937
        %vm939 = vcmp.eq.f32.partialorder %v936, %v938
        %v940 = vsel %vm939, %v935, inf
        %941 = vmin.xlane.f32.xlu0 %v940
        %v942 = vpop.xlane.xlu0 %941
        %v943 = vcvt.f32.s32 %v942
        %v944 = vcvt.f32.s32 %v938
        %v945 = vshll.u32 %v944, 16
        %v946 = vadd.s32 %v945, %v943
        %v947 = vand.u32 %v811, 65535
        %v948 = vshra.s32 %v811, 16
        %v949 = vcvt.s32.f32 %v947
        %v950 = vcvt.s32.f32 %v948
        %951 = vmin.xlane.f32.xlu0 %v950
        %v952 = vpop.xlane.xlu0 %951
        %vm953 = vcmp.eq.f32.partialorder %v950, %v952
        %v954 = vsel %vm953, %v949, inf
        %955 = vmin.xlane.f32.xlu0 %v954
        %v956 = vpop.xlane.xlu0 %955
        %v957 = vcvt.f32.s32 %v956
        %v958 = vcvt.f32.s32 %v952
        %v959 = vshll.u32 %v958, 16
        %v960 = vadd.s32 %v959, %v957
        %v961 = vand.u32 %v812, 65535
        %v962 = vshra.s32 %v812, 16
        %v963 = vcvt.s32.f32 %v961
        %v964 = vcvt.s32.f32 %v962
        %965 = vmin.xlane.f32.xlu0 %v964
        %v966 = vpop.xlane.xlu0 %965
        %vm967 = vcmp.eq.f32.partialorder %v964, %v966
        %v968 = vsel %vm967, %v963, inf
        %969 = vmin.xlane.f32.xlu0 %v968
        %v970 = vpop.xlane.xlu0 %969
        %v971 = vcvt.f32.s32 %v970
        %v972 = vcvt.f32.s32 %v966
        %v973 = vshll.u32 %v972, 16
        %v974 = vadd.s32 %v973, %v971
        %v975 = vand.u32 %v813, 65535
        %v976 = vshra.s32 %v813, 16
        %v977 = vcvt.s32.f32 %v975
        %v978 = vcvt.s32.f32 %v976
        %979 = vmin.xlane.f32.xlu0 %v978
        %v980 = vpop.xlane.xlu0 %979
        %vm981 = vcmp.eq.f32.partialorder %v978, %v980
        %v982 = vsel %vm981, %v977, inf
        %983 = vmin.xlane.f32.xlu0 %v982
        %v984 = vpop.xlane.xlu0 %983
        %v985 = vcvt.f32.s32 %v984
        %v986 = vcvt.f32.s32 %v980
        %v987 = vshll.u32 %v986, 16
        %v988 = vadd.s32 %v987, %v985
        %v989 = vand.u32 %v814, 65535
        %v990 = vshra.s32 %v814, 16
        %v991 = vcvt.s32.f32 %v989
        %v992 = vcvt.s32.f32 %v990
        %993 = vmin.xlane.f32.xlu0 %v992
        %v994 = vpop.xlane.xlu0 %993
        %vm995 = vcmp.eq.f32.partialorder %v992, %v994
        %v996 = vsel %vm995, %v991, inf
        %997 = vmin.xlane.f32.xlu0 %v996
        %v998 = vpop.xlane.xlu0 %997
        %v999 = vcvt.f32.s32 %v998
        %v1000 = vcvt.f32.s32 %v994
        %v1001 = vshll.u32 %v1000, 16
        %v1002 = vadd.s32 %v1001, %v999
        %v1003 = vand.u32 %v815, 65535
        %v1004 = vshra.s32 %v815, 16
        %v1005 = vcvt.s32.f32 %v1003
        %v1006 = vcvt.s32.f32 %v1004
        %1007 = vmin.xlane.f32.xlu0 %v1006
        %v1008 = vpop.xlane.xlu0 %1007
        %vm1009 = vcmp.eq.f32.partialorder %v1006, %v1008
        %v1010 = vsel %vm1009, %v1005, inf
        %1011 = vmin.xlane.f32.xlu0 %v1010
        %v1012 = vpop.xlane.xlu0 %1011
        %v1013 = vcvt.f32.s32 %v1012
        %v1014 = vcvt.f32.s32 %v1008
        %v1015 = vshll.u32 %v1014, 16
        %v1016 = vadd.s32 %v1015, %v1013
        %v1017 = vand.u32 %v816, 65535
        %v1018 = vshra.s32 %v816, 16
        %v1019 = vcvt.s32.f32 %v1017
        %v1020 = vcvt.s32.f32 %v1018
        %1021 = vmin.xlane.f32.xlu0 %v1020
        %v1022 = vpop.xlane.xlu0 %1021
        %vm1023 = vcmp.eq.f32.partialorder %v1020, %v1022
        %v1024 = vsel %vm1023, %v1019, inf
        %1025 = vmin.xlane.f32.xlu0 %v1024
        %v1026 = vpop.xlane.xlu0 %1025
        %v1027 = vcvt.f32.s32 %v1026
        %v1028 = vcvt.f32.s32 %v1022
        %v1029 = vshll.u32 %v1028, 16
        %v1030 = vadd.s32 %v1029, %v1027
        %v1031 = vand.u32 %v817, 65535
        %v1032 = vshra.s32 %v817, 16
        %v1033 = vcvt.s32.f32 %v1031
        %v1034 = vcvt.s32.f32 %v1032
        %1035 = vmin.xlane.f32.xlu0 %v1034
        %v1036 = vpop.xlane.xlu0 %1035
        %vm1037 = vcmp.eq.f32.partialorder %v1034, %v1036
        %v1038 = vsel %vm1037, %v1033, inf
        %1039 = vmin.xlane.f32.xlu0 %v1038
        %v1040 = vpop.xlane.xlu0 %1039
        %v1041 = vcvt.f32.s32 %v1040
        %v1042 = vcvt.f32.s32 %v1036
        %v1043 = vshll.u32 %v1042, 16
        %v1044 = vadd.s32 %v1043, %v1041
        %v1045 = vand.u32 %v818, 65535
        %v1046 = vshra.s32 %v818, 16
        %v1047 = vcvt.s32.f32 %v1045
        %v1048 = vcvt.s32.f32 %v1046
        %1049 = vmin.xlane.f32.xlu0 %v1048
        %v1050 = vpop.xlane.xlu0 %1049
        %vm1051 = vcmp.eq.f32.partialorder %v1048, %v1050
        %v1052 = vsel %vm1051, %v1047, inf
        %1053 = vmin.xlane.f32.xlu0 %v1052
        %v1054 = vpop.xlane.xlu0 %1053
        %v1055 = vcvt.f32.s32 %v1054
        %v1056 = vcvt.f32.s32 %v1050
        %v1057 = vshll.u32 %v1056, 16
        %v1058 = vadd.s32 %v1057, %v1055
        %v1059 = vand.u32 %v819, 65535
        %v1060 = vshra.s32 %v819, 16
        %v1061 = vcvt.s32.f32 %v1059
        %v1062 = vcvt.s32.f32 %v1060
        %1063 = vmin.xlane.f32.xlu0 %v1062
        %v1064 = vpop.xlane.xlu0 %1063
        %vm1065 = vcmp.eq.f32.partialorder %v1062, %v1064
        %v1066 = vsel %vm1065, %v1061, inf
        %1067 = vmin.xlane.f32.xlu0 %v1066
        %v1068 = vpop.xlane.xlu0 %1067
        %v1069 = vcvt.f32.s32 %v1068
        %v1070 = vcvt.f32.s32 %v1064
        %v1071 = vshll.u32 %v1070, 16
        %v1072 = vadd.s32 %v1071, %v1069
        %v1073 = vand.u32 %v820, 65535
        %v1074 = vshra.s32 %v820, 16
        %v1075 = vcvt.s32.f32 %v1073
        %v1076 = vcvt.s32.f32 %v1074
        %1077 = vmin.xlane.f32.xlu0 %v1076
        %v1078 = vpop.xlane.xlu0 %1077
        %vm1079 = vcmp.eq.f32.partialorder %v1076, %v1078
        %v1080 = vsel %vm1079, %v1075, inf
        %1081 = vmin.xlane.f32.xlu0 %v1080
        %v1082 = vpop.xlane.xlu0 %1081
        %v1083 = vcvt.f32.s32 %v1082
        %v1084 = vcvt.f32.s32 %v1078
        %v1085 = vshll.u32 %v1084, 16
        %v1086 = vadd.s32 %v1085, %v1083
        %v1087 = vand.u32 %v821, 65535
        %v1088 = vshra.s32 %v821, 16
        %v1089 = vcvt.s32.f32 %v1087
        %v1090 = vcvt.s32.f32 %v1088
        %1091 = vmin.xlane.f32.xlu0 %v1090
        %v1092 = vpop.xlane.xlu0 %1091
        %vm1093 = vcmp.eq.f32.partialorder %v1090, %v1092
        %v1094 = vsel %vm1093, %v1089, inf
        %1095 = vmin.xlane.f32.xlu0 %v1094
        %v1096 = vpop.xlane.xlu0 %1095
        %v1097 = vcvt.f32.s32 %v1096
        %v1098 = vcvt.f32.s32 %v1092
        %v1099 = vshll.u32 %v1098, 16
        %v1100 = vadd.s32 %v1099, %v1097
        %v1101 = vand.u32 %v822, 65535
        %v1102 = vshra.s32 %v822, 16
        %v1103 = vcvt.s32.f32 %v1101
        %v1104 = vcvt.s32.f32 %v1102
        %1105 = vmin.xlane.f32.xlu0 %v1104
        %v1106 = vpop.xlane.xlu0 %1105
        %vm1107 = vcmp.eq.f32.partialorder %v1104, %v1106
        %v1108 = vsel %vm1107, %v1103, inf
        %1109 = vmin.xlane.f32.xlu0 %v1108
        %v1110 = vpop.xlane.xlu0 %1109
        %v1111 = vcvt.f32.s32 %v1110
        %v1112 = vcvt.f32.s32 %v1106
        %v1113 = vshll.u32 %v1112, 16
        %v1114 = vadd.s32 %v1113, %v1111
        %v1115 = vand.u32 %v823, 65535
        %v1116 = vshra.s32 %v823, 16
        %v1117 = vcvt.s32.f32 %v1115
        %v1118 = vcvt.s32.f32 %v1116
        %1119 = vmin.xlane.f32.xlu0 %v1118
        %v1120 = vpop.xlane.xlu0 %1119
        %vm1121 = vcmp.eq.f32.partialorder %v1118, %v1120
        %v1122 = vsel %vm1121, %v1117, inf
        %1123 = vmin.xlane.f32.xlu0 %v1122
        %v1124 = vpop.xlane.xlu0 %1123
        %v1125 = vcvt.f32.s32 %v1124
        %v1126 = vcvt.f32.s32 %v1120
        %v1127 = vshll.u32 %v1126, 16
        %v1128 = vadd.s32 %v1127, %v1125
        %v1129 = vand.u32 %v824, 65535
        %v1130 = vshra.s32 %v824, 16
        %v1131 = vcvt.s32.f32 %v1129
        %v1132 = vcvt.s32.f32 %v1130
        %1133 = vmin.xlane.f32.xlu0 %v1132
        %v1134 = vpop.xlane.xlu0 %1133
        %vm1135 = vcmp.eq.f32.partialorder %v1132, %v1134
        %v1136 = vsel %vm1135, %v1131, inf
        %1137 = vmin.xlane.f32.xlu0 %v1136
        %v1138 = vpop.xlane.xlu0 %1137
        %v1139 = vcvt.f32.s32 %v1138
        %v1140 = vcvt.f32.s32 %v1134
        %v1141 = vshll.u32 %v1140, 16
        %v1142 = vadd.s32 %v1141, %v1139
        %v1143 = vand.u32 %v825, 65535
        %v1144 = vshra.s32 %v825, 16
        %v1145 = vcvt.s32.f32 %v1143
        %v1146 = vcvt.s32.f32 %v1144
        %1147 = vmin.xlane.f32.xlu0 %v1146
        %v1148 = vpop.xlane.xlu0 %1147
        %vm1149 = vcmp.eq.f32.partialorder %v1146, %v1148
        %v1150 = vsel %vm1149, %v1145, inf
        %1151 = vmin.xlane.f32.xlu0 %v1150
        %v1152 = vpop.xlane.xlu0 %1151
        %v1153 = vcvt.f32.s32 %v1152
        %v1154 = vcvt.f32.s32 %v1148
        %v1155 = vshll.u32 %v1154, 16
        %v1156 = vadd.s32 %v1155, %v1153
        %v1157 = vand.u32 %v826, 65535
        %v1158 = vshra.s32 %v826, 16
        %v1159 = vcvt.s32.f32 %v1157
        %v1160 = vcvt.s32.f32 %v1158
        %1161 = vmin.xlane.f32.xlu0 %v1160
        %v1162 = vpop.xlane.xlu0 %1161
        %vm1163 = vcmp.eq.f32.partialorder %v1160, %v1162
        %v1164 = vsel %vm1163, %v1159, inf
        %1165 = vmin.xlane.f32.xlu0 %v1164
        %v1166 = vpop.xlane.xlu0 %1165
        %v1167 = vcvt.f32.s32 %v1166
        %v1168 = vcvt.f32.s32 %v1162
        %v1169 = vshll.u32 %v1168, 16
        %v1170 = vadd.s32 %v1169, %v1167
        %v1171 = vand.u32 %v827, 65535
        %v1172 = vshra.s32 %v827, 16
        %v1173 = vcvt.s32.f32 %v1171
        %v1174 = vcvt.s32.f32 %v1172
        %1175 = vmin.xlane.f32.xlu0 %v1174
        %v1176 = vpop.xlane.xlu0 %1175
        %vm1177 = vcmp.eq.f32.partialorder %v1174, %v1176
        %v1178 = vsel %vm1177, %v1173, inf
        %1179 = vmin.xlane.f32.xlu0 %v1178
        %v1180 = vpop.xlane.xlu0 %1179
        %v1181 = vcvt.f32.s32 %v1180
        %v1182 = vcvt.f32.s32 %v1176
        %v1183 = vshll.u32 %v1182, 16
        %v1184 = vadd.s32 %v1183, %v1181
        %v1185 = vand.u32 %v828, 65535
        %v1186 = vshra.s32 %v828, 16
        %v1187 = vcvt.s32.f32 %v1185
        %v1188 = vcvt.s32.f32 %v1186
        %1189 = vmin.xlane.f32.xlu0 %v1188
        %v1190 = vpop.xlane.xlu0 %1189
        %vm1191 = vcmp.eq.f32.partialorder %v1188, %v1190
        %v1192 = vsel %vm1191, %v1187, inf
        %1193 = vmin.xlane.f32.xlu0 %v1192
        %v1194 = vpop.xlane.xlu0 %1193
        %v1195 = vcvt.f32.s32 %v1194
        %v1196 = vcvt.f32.s32 %v1190
        %v1197 = vshll.u32 %v1196, 16
        %v1198 = vadd.s32 %v1197, %v1195
        %v1199 = vand.u32 %v829, 65535
        %v1200 = vshra.s32 %v829, 16
        %v1201 = vcvt.s32.f32 %v1199
        %v1202 = vcvt.s32.f32 %v1200
        %1203 = vmin.xlane.f32.xlu0 %v1202
        %v1204 = vpop.xlane.xlu0 %1203
        %vm1205 = vcmp.eq.f32.partialorder %v1202, %v1204
        %v1206 = vsel %vm1205, %v1201, inf
        %1207 = vmin.xlane.f32.xlu0 %v1206
        %v1208 = vpop.xlane.xlu0 %1207
        %v1209 = vcvt.f32.s32 %v1208
        %v1210 = vcvt.f32.s32 %v1204
        %v1211 = vshll.u32 %v1210, 16
        %v1212 = vadd.s32 %v1211, %v1209
        %v1213 = vand.u32 %v830, 65535
        %v1214 = vshra.s32 %v830, 16
        %v1215 = vcvt.s32.f32 %v1213
        %v1216 = vcvt.s32.f32 %v1214
        %1217 = vmin.xlane.f32.xlu0 %v1216
        %v1218 = vpop.xlane.xlu0 %1217
        %vm1219 = vcmp.eq.f32.partialorder %v1216, %v1218
        %v1220 = vsel %vm1219, %v1215, inf
        %1221 = vmin.xlane.f32.xlu0 %v1220
        %v1222 = vpop.xlane.xlu0 %1221
        %v1223 = vcvt.f32.s32 %v1222
        %v1224 = vcvt.f32.s32 %v1218
        %v1225 = vshll.u32 %v1224, 16
        %v1226 = vadd.s32 %v1225, %v1223
        %v1227 = vand.u32 %v831, 65535
        %v1228 = vshra.s32 %v831, 16
        %v1229 = vcvt.s32.f32 %v1227
        %v1230 = vcvt.s32.f32 %v1228
        %1231 = vmin.xlane.f32.xlu0 %v1230
        %v1232 = vpop.xlane.xlu0 %1231
        %vm1233 = vcmp.eq.f32.partialorder %v1230, %v1232
        %v1234 = vsel %vm1233, %v1229, inf
        %1235 = vmin.xlane.f32.xlu0 %v1234
        %v1236 = vpop.xlane.xlu0 %1235
        %v1237 = vcvt.f32.s32 %v1236
        %v1238 = vcvt.f32.s32 %v1232
        %v1239 = vshll.u32 %v1238, 16
        %v1240 = vadd.s32 %v1239, %v1237
        %v1241 = vand.u32 %v832, 65535
        %v1242 = vshra.s32 %v832, 16
        %v1243 = vcvt.s32.f32 %v1241
        %v1244 = vcvt.s32.f32 %v1242
        %1245 = vmin.xlane.f32.xlu0 %v1244
        %v1246 = vpop.xlane.xlu0 %1245
        %vm1247 = vcmp.eq.f32.partialorder %v1244, %v1246
        %v1248 = vsel %vm1247, %v1243, inf
        %1249 = vmin.xlane.f32.xlu0 %v1248
        %v1250 = vpop.xlane.xlu0 %1249
        %v1251 = vcvt.f32.s32 %v1250
        %v1252 = vcvt.f32.s32 %v1246
        %v1253 = vshll.u32 %v1252, 16
        %v1254 = vadd.s32 %v1253, %v1251
        %v1255 = vand.u32 %v833, 65535
        %v1256 = vshra.s32 %v833, 16
        %v1257 = vcvt.s32.f32 %v1255
        %v1258 = vcvt.s32.f32 %v1256
        %1259 = vmin.xlane.f32.xlu0 %v1258
        %v1260 = vpop.xlane.xlu0 %1259
        %vm1261 = vcmp.eq.f32.partialorder %v1258, %v1260
        %v1262 = vsel %vm1261, %v1257, inf
        %1263 = vmin.xlane.f32.xlu0 %v1262
        %v1264 = vpop.xlane.xlu0 %1263
        %v1265 = vcvt.f32.s32 %v1264
        %v1266 = vcvt.f32.s32 %v1260
        %v1267 = vshll.u32 %v1266, 16
        %v1268 = vadd.s32 %v1267, %v1265
        %v1269 = vand.u32 %v834, 65535
        %v1270 = vshra.s32 %v834, 16
        %v1271 = vcvt.s32.f32 %v1269
        %v1272 = vcvt.s32.f32 %v1270
        %1273 = vmin.xlane.f32.xlu0 %v1272
        %v1274 = vpop.xlane.xlu0 %1273
        %vm1275 = vcmp.eq.f32.partialorder %v1272, %v1274
        %v1276 = vsel %vm1275, %v1271, inf
        %1277 = vmin.xlane.f32.xlu0 %v1276
        %v1278 = vpop.xlane.xlu0 %1277
        %v1279 = vcvt.f32.s32 %v1278
        %v1280 = vcvt.f32.s32 %v1274
        %v1281 = vshll.u32 %v1280, 16
        %v1282 = vadd.s32 %v1281, %v1279
        %vm1283 = vcmp.eq.s32.totalorder %v770, %v848
        %vm1284 = vcmp.eq.s32.totalorder %v770, %v862
        %vm1285 = vcmp.eq.s32.totalorder %v770, %v876
        %vm1286 = vcmp.eq.s32.totalorder %v770, %v890
        %vm1287 = vcmp.eq.s32.totalorder %v770, %v904
        %vm1288 = vcmp.eq.s32.totalorder %v770, %v918
        %vm1289 = vcmp.eq.s32.totalorder %v770, %v932
        %vm1290 = vcmp.eq.s32.totalorder %v770, %v946
        %vm1291 = vcmp.eq.s32.totalorder %v770, %v960
        %vm1292 = vcmp.eq.s32.totalorder %v770, %v974
        %vm1293 = vcmp.eq.s32.totalorder %v770, %v988
        %vm1294 = vcmp.eq.s32.totalorder %v770, %v1002
        %vm1295 = vcmp.eq.s32.totalorder %v770, %v1016
        %vm1296 = vcmp.eq.s32.totalorder %v770, %v1030
        %vm1297 = vcmp.eq.s32.totalorder %v770, %v1044
        %vm1298 = vcmp.eq.s32.totalorder %v770, %v1058
        %vm1299 = vcmp.eq.s32.totalorder %v770, %v1072
        %vm1300 = vcmp.eq.s32.totalorder %v770, %v1086
        %vm1301 = vcmp.eq.s32.totalorder %v770, %v1100
        %vm1302 = vcmp.eq.s32.totalorder %v770, %v1114
        %vm1303 = vcmp.eq.s32.totalorder %v770, %v1128
        %vm1304 = vcmp.eq.s32.totalorder %v770, %v1142
        %vm1305 = vcmp.eq.s32.totalorder %v770, %v1156
        %vm1306 = vcmp.eq.s32.totalorder %v770, %v1170
        %vm1307 = vcmp.eq.s32.totalorder %v770, %v1184
        %vm1308 = vcmp.eq.s32.totalorder %v770, %v1198
        %vm1309 = vcmp.eq.s32.totalorder %v770, %v1212
        %vm1310 = vcmp.eq.s32.totalorder %v770, %v1226
        %vm1311 = vcmp.eq.s32.totalorder %v770, %v1240
        %vm1312 = vcmp.eq.s32.totalorder %v770, %v1254
        %vm1313 = vcmp.eq.s32.totalorder %v770, %v1268
        %vm1314 = vcmp.eq.s32.totalorder %v770, %v1282
        %v1315 = vsel %vm1283, 1, 0
        %v1316 = vsel %vm1284, 1, 0
        %v1317 = vsel %vm1285, 1, 0
        %v1318 = vsel %vm1286, 1, 0
        %v1319 = vsel %vm1287, 1, 0
        %v1320 = vsel %vm1288, 1, 0
        %v1321 = vsel %vm1289, 1, 0
        %v1322 = vsel %vm1290, 1, 0
        %v1323 = vsel %vm1291, 1, 0
        %v1324 = vsel %vm1292, 1, 0
        %v1325 = vsel %vm1293, 1, 0
        %v1326 = vsel %vm1294, 1, 0
        %v1327 = vsel %vm1295, 1, 0
        %v1328 = vsel %vm1296, 1, 0
        %v1329 = vsel %vm1297, 1, 0
        %v1330 = vsel %vm1298, 1, 0
        %v1331 = vsel %vm1299, 1, 0
        %v1332 = vsel %vm1300, 1, 0
        %v1333 = vsel %vm1301, 1, 0
        %v1334 = vsel %vm1302, 1, 0
        %v1335 = vsel %vm1303, 1, 0
        %v1336 = vsel %vm1304, 1, 0
        %v1337 = vsel %vm1305, 1, 0
        %v1338 = vsel %vm1306, 1, 0
        %v1339 = vsel %vm1307, 1, 0
        %v1340 = vsel %vm1308, 1, 0
        %v1341 = vsel %vm1309, 1, 0
        %v1342 = vsel %vm1310, 1, 0
        %v1343 = vsel %vm1311, 1, 0
        %v1344 = vsel %vm1312, 1, 0
        %v1345 = vsel %vm1313, 1, 0
        %v1346 = vsel %vm1314, 1, 0
        %v1347 = vcvt.s32.f32 %v1315
        %v1348 = vcvt.s32.f32 %v1316
        %v1349 = vcvt.s32.f32 %v1317
        %v1350 = vcvt.s32.f32 %v1318
        %v1351 = vcvt.s32.f32 %v1319
        %v1352 = vcvt.s32.f32 %v1320
        %v1353 = vcvt.s32.f32 %v1321
        %v1354 = vcvt.s32.f32 %v1322
        %v1355 = vcvt.s32.f32 %v1323
        %v1356 = vcvt.s32.f32 %v1324
        %v1357 = vcvt.s32.f32 %v1325
        %v1358 = vcvt.s32.f32 %v1326
        %v1359 = vcvt.s32.f32 %v1327
        %v1360 = vcvt.s32.f32 %v1328
        %v1361 = vcvt.s32.f32 %v1329
        %v1362 = vcvt.s32.f32 %v1330
        %v1363 = vcvt.s32.f32 %v1331
        %v1364 = vcvt.s32.f32 %v1332
        %v1365 = vcvt.s32.f32 %v1333
        %v1366 = vcvt.s32.f32 %v1334
        %v1367 = vcvt.s32.f32 %v1335
        %v1368 = vcvt.s32.f32 %v1336
        %v1369 = vcvt.s32.f32 %v1337
        %v1370 = vcvt.s32.f32 %v1338
        %v1371 = vcvt.s32.f32 %v1339
        %v1372 = vcvt.s32.f32 %v1340
        %v1373 = vcvt.s32.f32 %v1341
        %v1374 = vcvt.s32.f32 %v1342
        %v1375 = vcvt.s32.f32 %v1343
        %v1376 = vcvt.s32.f32 %v1344
        %v1377 = vcvt.s32.f32 %v1345
        %v1378 = vcvt.s32.f32 %v1346
        %1379 = vmatprep.subr.mxu0 0.0
        %1380 = vmatpush1.msra.mxu0 %v280
        %1381 = vmatprep.subr.mxu0 0.0
        %1382 = vmatpush1.msra.mxu0 %v281
        %1383 = vmatprep.subr.mxu0 0.0
        %1384 = vmatpush1.msra.mxu0 %v282
        %1385 = vmatprep.subr.mxu0 0.0
        %1386 = vmatpush1.msra.mxu0 %v283
        %1387 = vmatprep.subr.mxu0 0.0
        %1388 = vmatpush1.msra.mxu0 %v284
        %1389 = vmatprep.subr.mxu0 0.0
        %1390 = vmatpush1.msra.mxu0 %v285
        %1391 = vmatprep.subr.mxu0 0.0
        %1392 = vmatpush1.msra.mxu0 %v286
        %1393 = vmatprep.subr.mxu0 0.0
        %1394 = vmatpush1.msra.mxu0 %v287
        %1395 = vmatprep.subr.mxu0 0.0
        %1396 = vmatpush1.msra.mxu0 %v288
        %1397 = vmatprep.subr.mxu0 0.0
        %1398 = vmatpush1.msra.mxu0 %v289
        %1399 = vmatprep.subr.mxu0 0.0
        %1400 = vmatpush1.msra.mxu0 %v290
        %1401 = vmatprep.subr.mxu0 0.0
        %1402 = vmatpush1.msra.mxu0 %v291
        %1403 = vmatprep.subr.mxu0 0.0
        %1404 = vmatpush1.msra.mxu0 %v292
        %1405 = vmatprep.subr.mxu0 0.0
        %1406 = vmatpush1.msra.mxu0 %v293
        %1407 = vmatprep.subr.mxu0 0.0
        %1408 = vmatpush1.msra.mxu0 %v294
        %1409 = vmatprep.subr.mxu0 0.0
        %1410 = vmatpush1.msra.mxu0 %v295
        %1411 = vmatprep.subr.mxu0 0.0
        %1412 = vmatpush1.msra.mxu0 0.0
        %1413 = vmatprep.subr.mxu0 0.0
        %1414 = vmatpush1.msra.mxu0 0.0
        %1415 = vmatprep.subr.mxu0 0.0
        %1416 = vmatpush1.msra.mxu0 0.0
        %1417 = vmatprep.subr.mxu0 0.0
        %1418 = vmatpush1.msra.mxu0 0.0
        %1419 = vmatprep.subr.mxu0 0.0
        %1420 = vmatpush1.msra.mxu0 0.0
        %1421 = vmatprep.subr.mxu0 0.0
        %1422 = vmatpush1.msra.mxu0 0.0
        %1423 = vmatprep.subr.mxu0 0.0
        %1424 = vmatpush1.msra.mxu0 0.0
        %1425 = vmatprep.subr.mxu0 0.0
        %1426 = vmatpush1.msra.mxu0 0.0
        %1427 = vmatprep.subr.mxu0 0.0
        %1428 = vmatpush1.msra.mxu0 0.0
        %1429 = vmatprep.subr.mxu0 0.0
        %1430 = vmatpush1.msra.mxu0 0.0
        %1431 = vmatprep.subr.mxu0 0.0
        %1432 = vmatpush1.msra.mxu0 0.0
        %1433 = vmatprep.subr.mxu0 0.0
        %1434 = vmatpush1.msra.mxu0 0.0
        %1435 = vmatprep.subr.mxu0 0.0
        %1436 = vmatpush1.msra.mxu0 0.0
        %1437 = vmatprep.subr.mxu0 0.0
        %1438 = vmatpush1.msra.mxu0 0.0
        %1439 = vmatprep.subr.mxu0 0.0
        %1440 = vmatpush1.msra.mxu0 0.0
        %1441 = vmatprep.subr.mxu0 0.0
        %1442 = vmatpush1.msra.mxu0 0.0
        %1443 = vmatprep.mubr.f32.mxu0 0.0
        %1444 = vmatmul.mubr.f32.gmra.mrb[0].mxu0 %v1347
        %v1445 = vpop.f32.mrb[0].mxu0
        %v1446 = vadd.f32 0.0, %v1445
        %v1447 = vpop.f32.mrb[0].mxu0
        %1448 = vmatprep.mubr.f32.mxu0 0.0
        %1449 = vmatmul.mubr.f32.gmra.mrb[0].mxu0 %v1348
        %v1450 = vpop.f32.mrb[0].mxu0
        %v1451 = vadd.f32 0.0, %v1450
        %v1452 = vpop.f32.mrb[0].mxu0
        %1453 = vmatprep.mubr.f32.mxu0 0.0
        %1454 = vmatmul.mubr.f32.gmra.mrb[0].mxu0 %v1349
        %v1455 = vpop.f32.mrb[0].mxu0
        %v1456 = vadd.f32 0.0, %v1455
        %v1457 = vpop.f32.mrb[0].mxu0
        %1458 = vmatprep.mubr.f32.mxu0 0.0
        %1459 = vmatmul.mubr.f32.gmra.mrb[0].mxu0 %v1350
        %v1460 = vpop.f32.mrb[0].mxu0
        %v1461 = vadd.f32 0.0, %v1460
        %v1462 = vpop.f32.mrb[0].mxu0
        %1463 = vmatprep.mubr.f32.mxu0 0.0
        %1464 = vmatmul.mubr.f32.gmra.mrb[0].mxu0 %v1351
        %v1465 = vpop.f32.mrb[0].mxu0
        %v1466 = vadd.f32 0.0, %v1465
        %v1467 = vpop.f32.mrb[0].mxu0
        %1468 = vmatprep.mubr.f32.mxu0 0.0
        %1469 = vmatmul.mubr.f32.gmra.mrb[0].mxu0 %v1352
        %v1470 = vpop.f32.mrb[0].mxu0
        %v1471 = vadd.f32 0.0, %v1470
        %v1472 = vpop.f32.mrb[0].mxu0
        %1473 = vmatprep.mubr.f32.mxu0 0.0
        %1474 = vmatmul.mubr.f32.gmra.mrb[0].mxu0 %v1353
        %v1475 = vpop.f32.mrb[0].mxu0
        %v1476 = vadd.f32 0.0, %v1475
        %v1477 = vpop.f32.mrb[0].mxu0
        %1478 = vmatprep.mubr.f32.mxu0 0.0
        %1479 = vmatmul.mubr.f32.gmra.mrb[0].mxu0 %v1354
        %v1480 = vpop.f32.mrb[0].mxu0
        %v1481 = vadd.f32 0.0, %v1480
        %v1482 = vpop.f32.mrb[0].mxu0
        %1483 = vmatprep.mubr.f32.mxu0 0.0
        %1484 = vmatmul.mubr.f32.gmra.mrb[0].mxu0 %v1355
        %v1485 = vpop.f32.mrb[0].mxu0
        %v1486 = vadd.f32 0.0, %v1485
        %v1487 = vpop.f32.mrb[0].mxu0
        %1488 = vmatprep.mubr.f32.mxu0 0.0
        %1489 = vmatmul.mubr.f32.gmra.mrb[0].mxu0 %v1356
        %v1490 = vpop.f32.mrb[0].mxu0
        %v1491 = vadd.f32 0.0, %v1490
        %v1492 = vpop.f32.mrb[0].mxu0
        %1493 = vmatprep.mubr.f32.mxu0 0.0
        %1494 = vmatmul.mubr.f32.gmra.mrb[0].mxu0 %v1357
        %v1495 = vpop.f32.mrb[0].mxu0
        %v1496 = vadd.f32 0.0, %v1495
        %v1497 = vpop.f32.mrb[0].mxu0
        %1498 = vmatprep.mubr.f32.mxu0 0.0
        %1499 = vmatmul.mubr.f32.gmra.mrb[0].mxu0 %v1358
        %v1500 = vpop.f32.mrb[0].mxu0
        %v1501 = vadd.f32 0.0, %v1500
        %v1502 = vpop.f32.mrb[0].mxu0
        %1503 = vmatprep.mubr.f32.mxu0 0.0
        %1504 = vmatmul.mubr.f32.gmra.mrb[0].mxu0 %v1359
        %v1505 = vpop.f32.mrb[0].mxu0
        %v1506 = vadd.f32 0.0, %v1505
        %v1507 = vpop.f32.mrb[0].mxu0
        %1508 = vmatprep.mubr.f32.mxu0 0.0
        %1509 = vmatmul.mubr.f32.gmra.mrb[0].mxu0 %v1360
        %v1510 = vpop.f32.mrb[0].mxu0
        %v1511 = vadd.f32 0.0, %v1510
        %v1512 = vpop.f32.mrb[0].mxu0
        %1513 = vmatprep.mubr.f32.mxu0 0.0
        %1514 = vmatmul.mubr.f32.gmra.mrb[0].mxu0 %v1361
        %v1515 = vpop.f32.mrb[0].mxu0
        %v1516 = vadd.f32 0.0, %v1515
        %v1517 = vpop.f32.mrb[0].mxu0
        %1518 = vmatprep.mubr.f32.mxu0 0.0
        %1519 = vmatmul.mubr.f32.gmra.mrb[0].mxu0 %v1362
        %v1520 = vpop.f32.mrb[0].mxu0
        %v1521 = vadd.f32 0.0, %v1520
        %v1522 = vpop.f32.mrb[0].mxu0
        %1523 = vmatprep.mubr.f32.mxu0 0.0
        %1524 = vmatmul.mubr.f32.gmra.mrb[0].mxu0 %v1363
        %v1525 = vpop.f32.mrb[0].mxu0
        %v1526 = vadd.f32 0.0, %v1525
        %v1527 = vpop.f32.mrb[0].mxu0
        %1528 = vmatprep.mubr.f32.mxu0 0.0
        %1529 = vmatmul.mubr.f32.gmra.mrb[0].mxu0 %v1364
        %v1530 = vpop.f32.mrb[0].mxu0
        %v1531 = vadd.f32 0.0, %v1530
        %v1532 = vpop.f32.mrb[0].mxu0
        %1533 = vmatprep.mubr.f32.mxu0 0.0
        %1534 = vmatmul.mubr.f32.gmra.mrb[0].mxu0 %v1365
        %v1535 = vpop.f32.mrb[0].mxu0
        %v1536 = vadd.f32 0.0, %v1535
        %v1537 = vpop.f32.mrb[0].mxu0
        %1538 = vmatprep.mubr.f32.mxu0 0.0
        %1539 = vmatmul.mubr.f32.gmra.mrb[0].mxu0 %v1366
        %v1540 = vpop.f32.mrb[0].mxu0
        %v1541 = vadd.f32 0.0, %v1540
        %v1542 = vpop.f32.mrb[0].mxu0
        %1543 = vmatprep.mubr.f32.mxu0 0.0
        %1544 = vmatmul.mubr.f32.gmra.mrb[0].mxu0 %v1367
        %v1545 = vpop.f32.mrb[0].mxu0
        %v1546 = vadd.f32 0.0, %v1545
        %v1547 = vpop.f32.mrb[0].mxu0
        %1548 = vmatprep.mubr.f32.mxu0 0.0
        %1549 = vmatmul.mubr.f32.gmra.mrb[0].mxu0 %v1368
        %v1550 = vpop.f32.mrb[0].mxu0
        %v1551 = vadd.f32 0.0, %v1550
        %v1552 = vpop.f32.mrb[0].mxu0
        %1553 = vmatprep.mubr.f32.mxu0 0.0
        %1554 = vmatmul.mubr.f32.gmra.mrb[0].mxu0 %v1369
        %v1555 = vpop.f32.mrb[0].mxu0
        %v1556 = vadd.f32 0.0, %v1555
        %v1557 = vpop.f32.mrb[0].mxu0
        %1558 = vmatprep.mubr.f32.mxu0 0.0
        %1559 = vmatmul.mubr.f32.gmra.mrb[0].mxu0 %v1370
        %v1560 = vpop.f32.mrb[0].mxu0
        %v1561 = vadd.f32 0.0, %v1560
        %v1562 = vpop.f32.mrb[0].mxu0
        %1563 = vmatprep.mubr.f32.mxu0 0.0
        %1564 = vmatmul.mubr.f32.gmra.mrb[0].mxu0 %v1371
        %v1565 = vpop.f32.mrb[0].mxu0
        %v1566 = vadd.f32 0.0, %v1565
        %v1567 = vpop.f32.mrb[0].mxu0
        %1568 = vmatprep.mubr.f32.mxu0 0.0
        %1569 = vmatmul.mubr.f32.gmra.mrb[0].mxu0 %v1372
        %v1570 = vpop.f32.mrb[0].mxu0
        %v1571 = vadd.f32 0.0, %v1570
        %v1572 = vpop.f32.mrb[0].mxu0
        %1573 = vmatprep.mubr.f32.mxu0 0.0
        %1574 = vmatmul.mubr.f32.gmra.mrb[0].mxu0 %v1373
        %v1575 = vpop.f32.mrb[0].mxu0
        %v1576 = vadd.f32 0.0, %v1575
        %v1577 = vpop.f32.mrb[0].mxu0
        %1578 = vmatprep.mubr.f32.mxu0 0.0
        %1579 = vmatmul.mubr.f32.gmra.mrb[0].mxu0 %v1374
        %v1580 = vpop.f32.mrb[0].mxu0
        %v1581 = vadd.f32 0.0, %v1580
        %v1582 = vpop.f32.mrb[0].mxu0
        %1583 = vmatprep.mubr.f32.mxu0 0.0
        %1584 = vmatmul.mubr.f32.gmra.mrb[0].mxu0 %v1375
        %v1585 = vpop.f32.mrb[0].mxu0
        %v1586 = vadd.f32 0.0, %v1585
        %v1587 = vpop.f32.mrb[0].mxu0
        %1588 = vmatprep.mubr.f32.mxu0 0.0
        %1589 = vmatmul.mubr.f32.gmra.mrb[0].mxu0 %v1376
        %v1590 = vpop.f32.mrb[0].mxu0
        %v1591 = vadd.f32 0.0, %v1590
        %v1592 = vpop.f32.mrb[0].mxu0
        %1593 = vmatprep.mubr.f32.mxu0 0.0
        %1594 = vmatmul.mubr.f32.gmra.mrb[0].mxu0 %v1377
        %v1595 = vpop.f32.mrb[0].mxu0
        %v1596 = vadd.f32 0.0, %v1595
        %v1597 = vpop.f32.mrb[0].mxu0
        %1598 = vmatprep.mubr.f32.mxu0 0.0
        %1599 = vmatmul.mubr.f32.gmra.mrb[0].mxu0 %v1378
        %v1600 = vpop.f32.mrb[0].mxu0
        %v1601 = vadd.f32 0.0, %v1600
        %v1602 = vpop.f32.mrb[0].mxu0
        %1603 = vdwg.mxu0
        %1604 = vst.msk [vmem:[%s246] sm:$0xff] %vm296, %v1446
        %1605 = vst.msk [vmem:[%s246 + $0x8] sm:$0xff] %vm296, %v1451
        %1606 = vst.msk [vmem:[%s246 + $0x10] sm:$0xff] %vm296, %v1456
        %1607 = vst.msk [vmem:[%s246 + $0x18] sm:$0xff] %vm296, %v1461
        %1608 = vst.msk [vmem:[%s246 + $0x20] sm:$0xff] %vm296, %v1466
        %1609 = vst.msk [vmem:[%s246 + $0x28] sm:$0xff] %vm296, %v1471
        %1610 = vst.msk [vmem:[%s246 + $0x30] sm:$0xff] %vm296, %v1476
        %1611 = vst.msk [vmem:[%s246 + $0x38] sm:$0xff] %vm296, %v1481
        %1612 = vst.msk [vmem:[%s246 + $0x40] sm:$0xff] %vm296, %v1486
        %1613 = vst.msk [vmem:[%s246 + $0x48] sm:$0xff] %vm296, %v1491
        %1614 = vst.msk [vmem:[%s246 + $0x50] sm:$0xff] %vm296, %v1496
        %1615 = vst.msk [vmem:[%s246 + $0x58] sm:$0xff] %vm296, %v1501
        %1616 = vst.msk [vmem:[%s246 + $0x60] sm:$0xff] %vm296, %v1506
        %1617 = vst.msk [vmem:[%s246 + $0x68] sm:$0xff] %vm296, %v1511
        %1618 = vst.msk [vmem:[%s246 + $0x70] sm:$0xff] %vm296, %v1516
        %1619 = vst.msk [vmem:[%s246 + $0x78] sm:$0xff] %vm296, %v1521
        %1620 = vst.msk [vmem:[%s246 + $0x80] sm:$0xff] %vm296, %v1526
        %1621 = vst.msk [vmem:[%s246 + $0x88] sm:$0xff] %vm296, %v1531
        %1622 = vst.msk [vmem:[%s246 + $0x90] sm:$0xff] %vm296, %v1536
        %1623 = vst.msk [vmem:[%s246 + $0x98] sm:$0xff] %vm296, %v1541
        %1624 = vst.msk [vmem:[%s246 + $0xa0] sm:$0xff] %vm296, %v1546
        %1625 = vst.msk [vmem:[%s246 + $0xa8] sm:$0xff] %vm296, %v1551
        %1626 = vst.msk [vmem:[%s246 + $0xb0] sm:$0xff] %vm296, %v1556
        %1627 = vst.msk [vmem:[%s246 + $0xb8] sm:$0xff] %vm296, %v1561
        %1628 = vst.msk [vmem:[%s246 + $0xc0] sm:$0xff] %vm296, %v1566
        %1629 = vst.msk [vmem:[%s246 + $0xc8] sm:$0xff] %vm296, %v1571
        %1630 = vst.msk [vmem:[%s246 + $0xd0] sm:$0xff] %vm296, %v1576
        %1631 = vst.msk [vmem:[%s246 + $0xd8] sm:$0xff] %vm296, %v1581
        %1632 = vst.msk [vmem:[%s246 + $0xe0] sm:$0xff] %vm296, %v1586
        %1633 = vst.msk [vmem:[%s246 + $0xe8] sm:$0xff] %vm296, %v1591
        %1634 = vst.msk [vmem:[%s246 + $0xf0] sm:$0xff] %vm296, %v1596
        %1635 = vst.msk [vmem:[%s246 + $0xf8] sm:$0xff] %vm296, %v1601
        %1636 = vxpose.xlu0.b32.start [1/16] %v803, 128
        %1637 = vxpose.xlu0.b32.cont [2/16] %v804, 128
        %1638 = vxpose.xlu0.b32.cont [3/16] %v805, 128
        %1639 = vxpose.xlu0.b32.cont [4/16] %v806, 128
        %1640 = vxpose.xlu0.b32.cont [5/16] %v807, 128
        %1641 = vxpose.xlu0.b32.cont [6/16] %v808, 128
        %1642 = vxpose.xlu0.b32.cont [7/16] %v809, 128
        %1643 = vxpose.xlu0.b32.cont [8/16] %v810, 128
        %1644 = vxpose.xlu0.b32.cont [9/16] %v811, 128
        %1645 = vxpose.xlu0.b32.cont [10/16] %v812, 128
        %1646 = vxpose.xlu0.b32.cont [11/16] %v813, 128
        %1647 = vxpose.xlu0.b32.cont [12/16] %v814, 128
        %1648 = vxpose.xlu0.b32.cont [13/16] %v815, 128
        %1649 = vxpose.xlu0.b32.cont [14/16] %v816, 128
        %1650 = vxpose.xlu0.b32.cont [15/16] %v817, 128
        %1651 = vxpose.xlu0.b32.end [16/16] %v818, 128
        %v1652 = vpop.trf.xlu0
        %v1653 = vpop.trf.xlu0
        %v1654 = vpop.trf.xlu0
        %v1655 = vpop.trf.xlu0
        %v1656 = vpop.trf.xlu0
        %v1657 = vpop.trf.xlu0
        %v1658 = vpop.trf.xlu0
        %v1659 = vpop.trf.xlu0
        %v1660 = vpop.trf.xlu0
        %v1661 = vpop.trf.xlu0
        %v1662 = vpop.trf.xlu0
        %v1663 = vpop.trf.xlu0
        %v1664 = vpop.trf.xlu0
        %v1665 = vpop.trf.xlu0
        %v1666 = vpop.trf.xlu0
        %v1667 = vpop.trf.xlu0
        %1668 = vxpose.xlu0.b32.start [1/16] %v819, 128
        %1669 = vxpose.xlu0.b32.cont [2/16] %v820, 128
        %1670 = vxpose.xlu0.b32.cont [3/16] %v821, 128
        %1671 = vxpose.xlu0.b32.cont [4/16] %v822, 128
        %1672 = vxpose.xlu0.b32.cont [5/16] %v823, 128
        %1673 = vxpose.xlu0.b32.cont [6/16] %v824, 128
        %1674 = vxpose.xlu0.b32.cont [7/16] %v825, 128
        %1675 = vxpose.xlu0.b32.cont [8/16] %v826, 128
        %1676 = vxpose.xlu0.b32.cont [9/16] %v827, 128
        %1677 = vxpose.xlu0.b32.cont [10/16] %v828, 128
        %1678 = vxpose.xlu0.b32.cont [11/16] %v829, 128
        %1679 = vxpose.xlu0.b32.cont [12/16] %v830, 128
        %1680 = vxpose.xlu0.b32.cont [13/16] %v831, 128
        %1681 = vxpose.xlu0.b32.cont [14/16] %v832, 128
        %1682 = vxpose.xlu0.b32.cont [15/16] %v833, 128
        %1683 = vxpose.xlu0.b32.end [16/16] %v834, 128
        %v1684 = vpop.trf.xlu0
        %v1685 = vpop.trf.xlu0
        %v1686 = vpop.trf.xlu0
        %v1687 = vpop.trf.xlu0
        %v1688 = vpop.trf.xlu0
        %v1689 = vpop.trf.xlu0
        %v1690 = vpop.trf.xlu0
        %v1691 = vpop.trf.xlu0
        %v1692 = vpop.trf.xlu0
        %v1693 = vpop.trf.xlu0
        %v1694 = vpop.trf.xlu0
        %v1695 = vpop.trf.xlu0
        %v1696 = vpop.trf.xlu0
        %v1697 = vpop.trf.xlu0
        %v1698 = vpop.trf.xlu0
        %v1699 = vpop.trf.xlu0
        %vm1700 = vcmp.lt.s32.totalorder %v1652, %v1654
        %v1701 = vsel %vm1700, %v1652, %v1654
        %vm1702 = vcmp.lt.s32.totalorder %v1653, %v1655
        %v1703 = vsel %vm1702, %v1653, %v1655
        %vm1704 = vcmp.lt.s32.totalorder %v1701, %v1656
        %v1705 = vsel %vm1704, %v1701, %v1656
        %vm1706 = vcmp.lt.s32.totalorder %v1703, %v1657
        %v1707 = vsel %vm1706, %v1703, %v1657
        %vm1708 = vcmp.lt.s32.totalorder %v1705, %v1658
        %v1709 = vsel %vm1708, %v1705, %v1658
        %vm1710 = vcmp.lt.s32.totalorder %v1707, %v1659
        %v1711 = vsel %vm1710, %v1707, %v1659
        %vm1712 = vcmp.lt.s32.totalorder %v1709, %v1660
        %v1713 = vsel %vm1712, %v1709, %v1660
        %vm1714 = vcmp.lt.s32.totalorder %v1711, %v1661
        %v1715 = vsel %vm1714, %v1711, %v1661
        %vm1716 = vcmp.lt.s32.totalorder %v1713, %v1662
        %v1717 = vsel %vm1716, %v1713, %v1662
        %vm1718 = vcmp.lt.s32.totalorder %v1715, %v1663
        %v1719 = vsel %vm1718, %v1715, %v1663
        %vm1720 = vcmp.lt.s32.totalorder %v1717, %v1664
        %v1721 = vsel %vm1720, %v1717, %v1664
        %vm1722 = vcmp.lt.s32.totalorder %v1719, %v1665
        %v1723 = vsel %vm1722, %v1719, %v1665
        %vm1724 = vcmp.lt.s32.totalorder %v1721, %v1666
        %v1725 = vsel %vm1724, %v1721, %v1666
        %vm1726 = vcmp.lt.s32.totalorder %v1723, %v1667
        %v1727 = vsel %vm1726, %v1723, %v1667
        %vm1728 = vcmp.lt.s32.totalorder %v1725, %v1727
        %v1729 = vsel %vm1728, %v1725, %v1727
        %v1730 = vrot.slane %v1729, 4
        %vm1731 = vcmp.lt.s32.totalorder %v1729, %v1730
        %v1732 = vsel %vm1731, %v1729, %v1730
        %v1733 = vrot.slane %v1732, 2
        %vm1734 = vcmp.lt.s32.totalorder %v1732, %v1733
        %v1735 = vsel %vm1734, %v1732, %v1733
        %v1736 = vrot.slane %v1735, 1
        %vm1737 = vcmp.lt.s32.totalorder %v1735, %v1736
        %v1738 = vsel %vm1737, %v1735, %v1736
        %vm1739 = vcmp.lt.s32.totalorder %v1684, %v1686
        %v1740 = vsel %vm1739, %v1684, %v1686
        %vm1741 = vcmp.lt.s32.totalorder %v1685, %v1687
        %v1742 = vsel %vm1741, %v1685, %v1687
        %vm1743 = vcmp.lt.s32.totalorder %v1740, %v1688
        %v1744 = vsel %vm1743, %v1740, %v1688
        %vm1745 = vcmp.lt.s32.totalorder %v1742, %v1689
        %v1746 = vsel %vm1745, %v1742, %v1689
        %vm1747 = vcmp.lt.s32.totalorder %v1744, %v1690
        %v1748 = vsel %vm1747, %v1744, %v1690
        %vm1749 = vcmp.lt.s32.totalorder %v1746, %v1691
        %v1750 = vsel %vm1749, %v1746, %v1691
        %vm1751 = vcmp.lt.s32.totalorder %v1748, %v1692
        %v1752 = vsel %vm1751, %v1748, %v1692
        %vm1753 = vcmp.lt.s32.totalorder %v1750, %v1693
        %v1754 = vsel %vm1753, %v1750, %v1693
        %vm1755 = vcmp.lt.s32.totalorder %v1752, %v1694
        %v1756 = vsel %vm1755, %v1752, %v1694
        %vm1757 = vcmp.lt.s32.totalorder %v1754, %v1695
        %v1758 = vsel %vm1757, %v1754, %v1695
        %vm1759 = vcmp.lt.s32.totalorder %v1756, %v1696
        %v1760 = vsel %vm1759, %v1756, %v1696
        %vm1761 = vcmp.lt.s32.totalorder %v1758, %v1697
        %v1762 = vsel %vm1761, %v1758, %v1697
        %vm1763 = vcmp.lt.s32.totalorder %v1760, %v1698
        %v1764 = vsel %vm1763, %v1760, %v1698
        %vm1765 = vcmp.lt.s32.totalorder %v1762, %v1699
        %v1766 = vsel %vm1765, %v1762, %v1699
        %vm1767 = vcmp.lt.s32.totalorder %v1764, %v1766
        %v1768 = vsel %vm1767, %v1764, %v1766
        %v1769 = vrot.slane %v1768, 4
        %vm1770 = vcmp.lt.s32.totalorder %v1768, %v1769
        %v1771 = vsel %vm1770, %v1768, %v1769
        %v1772 = vrot.slane %v1771, 2
        %vm1773 = vcmp.lt.s32.totalorder %v1771, %v1772
        %v1774 = vsel %vm1773, %v1771, %v1772
        %v1775 = vrot.slane %v1774, 1
        %vm1776 = vcmp.lt.s32.totalorder %v1774, %v1775
        %v1777 = vsel %vm1776, %v1774, %v1775
        %v1778 = vcombine.low %v1738, %v1777
        %v1780 = vunpack.c.l.s4 1966171168
        %v1781 = vunpack.c.0.s8 %v1780
        %v1782 = vlaneseq
        %v1783 = vshrl.u32 %v1782, 7
        %v1784 = vsub.s32 %v1781, %v1783
        %v1785 = vrot.slane %v1778, %v1784
        %v1787 = vunpack.c.l.s4 1966171168
        %v1788 = vunpack.c.0.s8 %v1787
        %v1789 = vlaneseq
        %v1790 = vshrl.u32 %v1789, 7
        %v1791 = vsub.s32 %v1788, %v1790
        %v1792 = vrot.slane %v1785, %v1791
        %v1793 = vlaneseq
        %vm1794 = vcmp.ge.s32.totalorder %v1793, 0
        %vm1795 = vcmp.lt.s32.totalorder %v1793, 256
        %vm1796 = vmand %vm1794, %vm1795
        %1797 = vst.msk [vmem:[%s229] sm:$0x3] %vm1796, %v1792
        %v1798 = vsub.f32 %v1446, %v248
        %v1799 = vsub.f32 %v1451, %v249
        %v1800 = vsub.f32 %v1456, %v250
        %v1801 = vsub.f32 %v1461, %v251
        %v1802 = vsub.f32 %v1466, %v252
        %v1803 = vsub.f32 %v1471, %v253
        %v1804 = vsub.f32 %v1476, %v254
        %v1805 = vsub.f32 %v1481, %v255
        %v1806 = vsub.f32 %v1486, %v256
        %v1807 = vsub.f32 %v1491, %v257
        %v1808 = vsub.f32 %v1496, %v258
        %v1809 = vsub.f32 %v1501, %v259
        %v1810 = vsub.f32 %v1506, %v260
        %v1811 = vsub.f32 %v1511, %v261
        %v1812 = vsub.f32 %v1516, %v262
        %v1813 = vsub.f32 %v1521, %v263
        %v1814 = vsub.f32 %v1526, %v264
        %v1815 = vsub.f32 %v1531, %v265
        %v1816 = vsub.f32 %v1536, %v266
        %v1817 = vsub.f32 %v1541, %v267
        %v1818 = vsub.f32 %v1546, %v268
        %v1819 = vsub.f32 %v1551, %v269
        %v1820 = vsub.f32 %v1556, %v270
        %v1821 = vsub.f32 %v1561, %v271
        %v1822 = vsub.f32 %v1566, %v272
        %v1823 = vsub.f32 %v1571, %v273
        %v1824 = vsub.f32 %v1576, %v274
        %v1825 = vsub.f32 %v1581, %v275
        %v1826 = vsub.f32 %v1586, %v276
        %v1827 = vsub.f32 %v1591, %v277
        %v1828 = vsub.f32 %v1596, %v278
        %v1829 = vsub.f32 %v1601, %v279
        %v1830 = vmul.f32 %v1798, %v1798
        %v1831 = vmul.f32 %v1799, %v1799
        %v1832 = vmul.f32 %v1800, %v1800
        %v1833 = vmul.f32 %v1801, %v1801
        %v1834 = vmul.f32 %v1802, %v1802
        %v1835 = vmul.f32 %v1803, %v1803
        %v1836 = vmul.f32 %v1804, %v1804
        %v1837 = vmul.f32 %v1805, %v1805
        %v1838 = vmul.f32 %v1806, %v1806
        %v1839 = vmul.f32 %v1807, %v1807
        %v1840 = vmul.f32 %v1808, %v1808
        %v1841 = vmul.f32 %v1809, %v1809
        %v1842 = vmul.f32 %v1810, %v1810
        %v1843 = vmul.f32 %v1811, %v1811
        %v1844 = vmul.f32 %v1812, %v1812
        %v1845 = vmul.f32 %v1813, %v1813
        %v1846 = vmul.f32 %v1814, %v1814
        %v1847 = vmul.f32 %v1815, %v1815
        %v1848 = vmul.f32 %v1816, %v1816
        %v1849 = vmul.f32 %v1817, %v1817
        %v1850 = vmul.f32 %v1818, %v1818
        %v1851 = vmul.f32 %v1819, %v1819
        %v1852 = vmul.f32 %v1820, %v1820
        %v1853 = vmul.f32 %v1821, %v1821
        %v1854 = vmul.f32 %v1822, %v1822
        %v1855 = vmul.f32 %v1823, %v1823
        %v1856 = vmul.f32 %v1824, %v1824
        %v1857 = vmul.f32 %v1825, %v1825
        %v1858 = vmul.f32 %v1826, %v1826
        %v1859 = vmul.f32 %v1827, %v1827
        %v1860 = vmul.f32 %v1828, %v1828
        %v1861 = vmul.f32 %v1829, %v1829
        %v1862 = vsel %vm296, %v1830, 0.0
        %v1863 = vsel %vm296, %v1831, 0.0
        %v1864 = vadd.f32 %v1862, %v1863
        %v1865 = vsel %vm296, %v1832, 0.0
        %v1866 = vadd.f32 %v1864, %v1865
        %v1867 = vsel %vm296, %v1833, 0.0
        %v1868 = vadd.f32 %v1866, %v1867
        %v1869 = vsel %vm296, %v1834, 0.0
        %v1870 = vadd.f32 %v1868, %v1869
        %v1871 = vsel %vm296, %v1835, 0.0
        %v1872 = vadd.f32 %v1870, %v1871
        %v1873 = vsel %vm296, %v1836, 0.0
        %v1874 = vadd.f32 %v1872, %v1873
        %v1875 = vsel %vm296, %v1837, 0.0
        %v1876 = vadd.f32 %v1874, %v1875
        %v1877 = vsel %vm296, %v1838, 0.0
        %v1878 = vadd.f32 %v1876, %v1877
        %v1879 = vsel %vm296, %v1839, 0.0
        %v1880 = vadd.f32 %v1878, %v1879
        %v1881 = vsel %vm296, %v1840, 0.0
        %v1882 = vadd.f32 %v1880, %v1881
        %v1883 = vsel %vm296, %v1841, 0.0
        %v1884 = vadd.f32 %v1882, %v1883
        %v1885 = vsel %vm296, %v1842, 0.0
        %v1886 = vadd.f32 %v1884, %v1885
        %v1887 = vsel %vm296, %v1843, 0.0
        %v1888 = vadd.f32 %v1886, %v1887
        %v1889 = vsel %vm296, %v1844, 0.0
        %v1890 = vadd.f32 %v1888, %v1889
        %v1891 = vsel %vm296, %v1845, 0.0
        %v1892 = vadd.f32 %v1890, %v1891
        %v1893 = vsel %vm296, %v1846, 0.0
        %v1894 = vadd.f32 %v1892, %v1893
        %v1895 = vsel %vm296, %v1847, 0.0
        %v1896 = vadd.f32 %v1894, %v1895
        %v1897 = vsel %vm296, %v1848, 0.0
        %v1898 = vadd.f32 %v1896, %v1897
        %v1899 = vsel %vm296, %v1849, 0.0
        %v1900 = vadd.f32 %v1898, %v1899
        %v1901 = vsel %vm296, %v1850, 0.0
        %v1902 = vadd.f32 %v1900, %v1901
        %v1903 = vsel %vm296, %v1851, 0.0
        %v1904 = vadd.f32 %v1902, %v1903
        %v1905 = vsel %vm296, %v1852, 0.0
        %v1906 = vadd.f32 %v1904, %v1905
        %v1907 = vsel %vm296, %v1853, 0.0
        %v1908 = vadd.f32 %v1906, %v1907
        %v1909 = vsel %vm296, %v1854, 0.0
        %v1910 = vadd.f32 %v1908, %v1909
        %v1911 = vsel %vm296, %v1855, 0.0
        %v1912 = vadd.f32 %v1910, %v1911
        %v1913 = vsel %vm296, %v1856, 0.0
        %v1914 = vadd.f32 %v1912, %v1913
        %v1915 = vsel %vm296, %v1857, 0.0
        %v1916 = vadd.f32 %v1914, %v1915
        %v1917 = vsel %vm296, %v1858, 0.0
        %v1918 = vadd.f32 %v1916, %v1917
        %v1919 = vsel %vm296, %v1859, 0.0
        %v1920 = vadd.f32 %v1918, %v1919
        %v1921 = vsel %vm296, %v1860, 0.0
        %v1922 = vadd.f32 %v1920, %v1921
        %v1923 = vsel %vm296, %v1861, 0.0
        %v1924 = vadd.f32 %v1922, %v1923
        %v1925 = vrot.slane %v1924, 4
        %v1926 = vadd.f32 %v1924, %v1925
        %v1927 = vrot.slane %v1926, 2
        %v1928 = vadd.f32 %v1926, %v1927
        %v1929 = vrot.slane %v1928, 1
        %v1930 = vadd.f32 %v1928, %v1929
        %vm1931 = vcmask 516096
        %1932 = vst.msk [vmem:[%s235] sm:$0x1] %vm1931, %v1930
        %s1933 = smul.u32 32, %s23
        %p1934 = scmp.lt.s32.totalorder %s1933, 63
        %s1935 = scalar_select %p1934, %s1933, 63
        %s1936 = smul.addr %s1935, 8
        %s1937 = scalar_lea.vmem %s3, %s1936
        %s1938 = sand.u32 %s125, 1
        %s1939 = scalar_lea.sflag [#allocation3], %s1938
        %s1940 = sand.u32 %s125, 1
        %s1941 = smul.addr %s1940, 2
        %s1942 = scalar_lea.vmem [#allocation2], %s1941
        %s1943 = sand.u32 %s151, 1
        %s1944 = scalar_lea.sflag [#allocation5], %s1943
        %s1945 = sand.u32 %s151, 1
        %s1946 = scalar_lea.vmem [#allocation4], %s1945
        // Predicated region
        $region33: #{tpu_custom_call.1} parent=31 // pred_check
          %p1947 = pneg %p109
        $region34: #{tpu_custom_call.1} parent=31 // pred_check_branch
          %1949 = sbr.rel (%p1947) target = $region36
        $region35: #{tpu_custom_call.1} parent=31 // pred_region
          %s1950 = smul.u32 32, %s23
        $region36: #{tpu_custom_call.1} parent=31 // pred_fallthru
          _
        // Predicated region
        $region37: #{tpu_custom_call.1} parent=31 // pred_check
          %p1951 = pneg %p135
        $region38: #{tpu_custom_call.1} parent=31 // pred_check_branch
          %1953 = sbr.rel (%p1951) target = $region40
        $region39: #{tpu_custom_call.1} parent=31 // pred_region
          %s1955 = ssub.s32 32, 32
          %1956 = vsyncadd %s1939, %s1955
          %s1957 = smul.addr %s23, 2
          %s1958 = smul.addr %s1957, 16
          %s1959 = scalar_lea.hbm %s4, %s1958
          %s1961 = sshll.u32 %s1942, 4
          %s1962 = int_to_ptr.vmem [resolvable:$true] %s1961
          %1964 = dma.vmem_to_hbm [thread:$0]  %s1962, 32, %s1959, %s1939
        $region40: #{tpu_custom_call.1} parent=31 // pred_fallthru
          _
        // Predicated region
        $region41: #{tpu_custom_call.1} parent=31 // pred_check
          %p1965 = pneg %p161
        $region42: #{tpu_custom_call.1} parent=31 // pred_check_branch
          %1967 = sbr.rel (%p1965) target = $region44
        $region43: #{tpu_custom_call.1} parent=31 // pred_region
          %s1969 = ssub.s32 16, 16
          %1970 = vsyncadd %s1944, %s1969
          %s1971 = smul.addr %s23, 16
          %s1972 = scalar_lea.hbm %s5, %s1971
          %s1974 = sshll.u32 %s1946, 4
          %s1975 = int_to_ptr.vmem [resolvable:$true] %s1974
          %1977 = dma.vmem_to_hbm [thread:$0]  %s1975, 16, %s1972, %s1944
        $region44: #{tpu_custom_call.1} parent=31 // pred_fallthru
          _
      $region32: #{tpu_custom_call.1} parent=5 // pred_fallthru
        _
      %p1978 = scmp.le.s32.totalorder 2, %s18
      // Predicated region
      $region45: #{tpu_custom_call.1} parent=5 // pred_check
        %p1979 = pneg %p1978
      $region46: #{tpu_custom_call.1} parent=5 // pred_check_branch
        %1981 = sbr.rel (%p1979) target = $region48
      $region47: #{tpu_custom_call.1} parent=5 // pred_region
        %s1982 = ssub.s32 %s18, 2
        // Predicated region
        $region49: #{tpu_custom_call.1} parent=47 // pred_check
          %p1983 = pneg %p115
        $region50: #{tpu_custom_call.1} parent=47 // pred_check_branch
          %1985 = sbr.rel (%p1983) target = $region52
        $region51: #{tpu_custom_call.1} parent=47 // pred_region
          %s1986 = smul.u32 32, %s24
          %p1987 = scmp.lt.s32.totalorder %s1986, 63
          %s1988 = scalar_select %p1987, %s1986, 63
          %s1989 = smul.addr %s1988, 8
          %s1990 = scalar_lea.vmem %s3, %s1989
        $region52: #{tpu_custom_call.1} parent=47 // pred_fallthru
          _
        // Predicated region
        $region53: #{tpu_custom_call.1} parent=47 // pred_check
          %p1991 = pneg %p141
        $region54: #{tpu_custom_call.1} parent=47 // pred_check_branch
          %1993 = sbr.rel (%p1991) target = $region56
        $region55: #{tpu_custom_call.1} parent=47 // pred_region
          %s1994 = sand.u32 %s126, 1
          %s1995 = scalar_lea.sflag [#allocation3], %s1994
          %s1996 = sand.u32 %s126, 1
          %s1997 = smul.addr %s1996, 2
          %s1998 = scalar_lea.vmem [#allocation2], %s1997
          %1999 = dma.done %s1995, 32
        $region56: #{tpu_custom_call.1} parent=47 // pred_fallthru
          _
        // Predicated region
        $region57: #{tpu_custom_call.1} parent=47 // pred_check
          %p2000 = pneg %p167
        $region58: #{tpu_custom_call.1} parent=47 // pred_check_branch
          %2002 = sbr.rel (%p2000) target = $region60
        $region59: #{tpu_custom_call.1} parent=47 // pred_region
          %s2003 = sand.u32 %s152, 1
          %s2004 = scalar_lea.sflag [#allocation5], %s2003
          %s2005 = sand.u32 %s152, 1
          %s2006 = scalar_lea.vmem [#allocation4], %s2005
          %2007 = dma.done %s2004, 16
        $region60: #{tpu_custom_call.1} parent=47 // pred_fallthru
          _
      $region48: #{tpu_custom_call.1} parent=5 // pred_fallthru
        _
    $region6: #{tpu_custom_call.1} parent=1 // loop_footer
      %s22 = sadd.s32 1, %s18
    $region7: #{tpu_custom_call.1} parent=1 // loop_footer_branch
      %17 = sbr.rel target = $region3
    $region8: #{tpu_custom_call.1} parent=1 // loop_exit
      _
    %2008 = vsyncpa [#allocation3], 1
    %s2009 = scalar_lea.sflag [#allocation3], 1
    %2010 = vsyncpa %s2009, 1
    %2011 = vsyncpa [#allocation5], 1
    %s2012 = scalar_lea.sflag [#allocation5], 1
    %2013 = vsyncpa %s2012, 1

</llo_original>
